<compile_context>
chip_gen: v6e
topology: v6e:2x2x1
jax: 0.10.0
libtpu: 0.0.40
codegen_flags: <defaults>
</compile_context>

<pallas_src>
import functools

import jax
import jax.numpy as jnp
import numpy as np
from jax.experimental import pallas as pl
from jax.experimental.pallas import tpu as pltpu

LANE = 128


def _round_up(v, m):
    return ((v + m - 1) // m) * m


# ----------------------------- Pallas kernel ------------------------------- #

def attention_kernel(x_ref, wqkv_ref, bqkv_ref, wout_ref, bout_ref, o_ref,
                     *, heads, dim_head, batch_block, seq, inner_pad):
    bb, N, H, dh, IP = batch_block, seq, heads, dim_head, inner_pad
    rows = bb * N
    Dp = x_ref.shape[-1]

    x = x_ref[...].reshape(rows, Dp)                           # (rows, Dp) bf16

    # Fused qkv projection: one lane-wide matmul, f32 accumulation.
    # Column layout: s*IP + h*dim_head + d  (softmax scale pre-folded into q).
    qkv = jnp.dot(x, wqkv_ref[...],
                  preferred_element_type=jnp.float32) + bqkv_ref[...]
    qkv16 = qkv.astype(jnp.bfloat16)                           # (rows, 3*IP)

    def heads_of(base):
        # gather (batch, head) tiles: (bb*H, N, dh), all slices static & tiny
        parts = [qkv16[b * N:(b + 1) * N, base + h * dh:base + (h + 1) * dh]
                 for b in range(bb) for h in range(H)]
        return jnp.stack(parts, axis=0)

    q = heads_of(0)                                            # (bb*H, N, dh)
    k = heads_of(IP)
    v = heads_of(2 * IP)

    # scores + softmax (f32 statistics)
    dots = jax.lax.dot_general(q, k, (((2,), (2,)), ((0,), (0,))),
                               preferred_element_type=jnp.float32)  # (bbH,N,N)
    dots = dots - jnp.max(dots, axis=-1, keepdims=True)
    p = jnp.exp(dots)
    attn = p * pl.reciprocal(jnp.sum(p, axis=-1, keepdims=True), approx=True)
    # attn_dropout(p=0.0) and output Dropout(p=0.0) are identity in eval mode.

    ctx = jax.lax.dot_general(attn.astype(jnp.bfloat16), v,
                              (((2,), (1,)), ((0,), (0,))),
                              preferred_element_type=jnp.float32)  # (bbH,N,dh)

    # repack 'b h n d -> (b n) (h d)' so the output projection is one matmul;
    # the H-way reduction happens inside the MXU contraction over inner.
    packed = jnp.concatenate(
        [jnp.concatenate([ctx[b * H + h] for h in range(H)], axis=-1)
         for b in range(bb)], axis=0)                          # (rows, H*dh)

    out = jnp.dot(packed.astype(jnp.bfloat16), wout_ref[...],
                  preferred_element_type=jnp.float32) + bout_ref[...]  # (rows, Dp)
    o_ref[...] = out.reshape(bb, N, Dp)


# ------------------------------ wrapper ------------------------------------ #

def prepare_params(raw, *, heads, dim_head, dim):
    """PyTorch-layout weights -> fused, scale-folded, lane-padded bf16 operands."""
    inner = heads * dim_head
    Dp = _round_up(dim, LANE)
    IP = _round_up(inner, LANE)
    scale = dim_head ** (-0.5)

    # Conv1d weight (3*inner, dim): output channel c = s*inner + d*heads + h.
    w = raw["qkv_w"].reshape(3, dim_head, heads, dim)          # [s, d, h, Din]
    w = jnp.transpose(w, (0, 2, 1, 3))                         # [s, h, d, Din]
    b = raw["qkv_b"].reshape(3, dim_head, heads)
    b = jnp.transpose(b, (0, 2, 1))                            # [s, h, d]
    # Fold softmax scale into the q projection (section s=0).
    w = w.at[0].multiply(scale)
    b = b.at[0].multiply(scale)

    # Fused qkv weight (Dp, 3*IP); column index = s*IP + h*dim_head + d.
    wqkv = jnp.zeros((3, IP, Dp), jnp.float32)
    wqkv = wqkv.at[:, :inner, :dim].set(w.reshape(3, inner, dim))
    wqkv = jnp.transpose(wqkv, (2, 0, 1)).reshape(Dp, 3 * IP).astype(jnp.bfloat16)

    bqkv = jnp.zeros((3, IP), jnp.float32)
    bqkv = bqkv.at[:, :inner].set(b.reshape(3, inner)).reshape(1, 3 * IP)

    # to_out Linear(inner, dim): weight (dim, inner), input feature = h*dh + d.
    wout = jnp.zeros((inner, Dp), jnp.float32)
    wout = wout.at[:, :dim].set(raw["out_w"].T).astype(jnp.bfloat16)
    bout = jnp.zeros((1, Dp), jnp.float32).at[0, :dim].set(raw["out_b"])

    return {"wqkv": wqkv, "bqkv": bqkv, "wout": wout, "bout": bout,
            "Dp": Dp, "IP": IP, "inner": inner}


def attention_forward(x, params, *, heads, dim_head):
    """x: (B, N, D) float32 -> (B, N, D) float32."""
    B, N, D = x.shape
    Dp, IP, inner = params["Dp"], params["IP"], params["inner"]

    # pre-cast to bf16 + lane-pad in the wrapper (halves the x DMA).
    x_p = jnp.zeros((B, N, Dp), jnp.bfloat16).at[:, :, :D].set(
        x.astype(jnp.bfloat16))

    # Single fat grid step on single-TensorCore chips (v5e/v6e); 2-wide
    # "parallel" grid on v7x so both TensorCores get one batch block.
    dev_kind = jax.devices()[0].device_kind.lower()
    two_cores = "7" in dev_kind
    g = 2 if (two_cores and B >= 2 and B % 2 == 0) else 1
    bb = B // g

    kernel = functools.partial(attention_kernel, heads=heads, dim_head=dim_head,
                               batch_block=bb, seq=N, inner_pad=IP)

    out_p = pl.pallas_call(
        kernel,
        out_shape=jax.ShapeDtypeStruct((B, N, Dp), jnp.float32),
        grid_spec=pltpu.PrefetchScalarGridSpec(
            num_scalar_prefetch=0,
            grid=(g,),
            in_specs=[
                pl.BlockSpec((bb, N, Dp), lambda i: (i, 0, 0)),     # x
                pl.BlockSpec((Dp, 3 * IP), lambda i: (0, 0)),       # Wqkv (fused)
                pl.BlockSpec((1, 3 * IP), lambda i: (0, 0)),        # bqkv
                pl.BlockSpec((inner, Dp), lambda i: (0, 0)),        # Wout
                pl.BlockSpec((1, Dp), lambda i: (0, 0)),            # bout
            ],
            out_specs=pl.BlockSpec((bb, N, Dp), lambda i: (i, 0, 0)),
        ),
        compiler_params=pltpu.CompilerParams(
            dimension_semantics=("parallel",)),
    )(x_p, params["wqkv"], params["bqkv"], params["wout"], params["bout"])

    return out_p[:, :, :D]


# -------------------- pure-JAX reference (PyTorch layout) ------------------ #

def reference_attention(x, raw, *, heads, dim_head):
    B, N, D = x.shape
    inner = heads * dim_head
    # Conv1d(k=1) on (B, D, N) == per-token linear map.
    qkv = jnp.einsum("bnd,cd->bnc", x, raw["qkv_w"]) + raw["qkv_b"]
    q, k, v = jnp.split(qkv, 3, axis=-1)

    def to_heads(t):   # rearrange 'b (d h) n -> b h n d'  (channel = d*heads + h)
        return t.reshape(B, N, dim_head, heads).transpose(0, 3, 1, 2)

    qh, kh, vh = map(to_heads, (q, k, v))                       # (B, H, N, dh)
    dots = jnp.einsum("bhid,bhjd->bhij", qh, kh) * (dim_head ** -0.5)
    attn = jax.nn.softmax(dots, axis=-1)
    out = jnp.einsum("bhij,bhjd->bhid", attn, vh)
    out = out.transpose(0, 2, 1, 3).reshape(B, N, inner)        # 'b h n d -> b n (h d)'
    return out @ raw["out_w"].T + raw["out_b"]


# ------------------------------- main --------------------------------------- #

if __name__ == "__main__":
    B, N, D = 2, 8, 32
    heads, dim_head = 4, 8
    inner = heads * dim_head

    key = jax.random.PRNGKey(0)
    keys = jax.random.split(key, 6)

    x = jax.random.normal(keys[0], (B, N, D), dtype=jnp.float32)

    # Deterministic synthetic parameters in PyTorch shapes / layout.
    raw = {
        "qkv_w": jax.random.normal(keys[1], (3 * inner, D), jnp.float32) * 0.1,  # Conv1d (Cout, Cin, 1) squeezed
        "qkv_b": jax.random.normal(keys[2], (3 * inner,), jnp.float32) * 0.1,
        "out_w": jax.random.normal(keys[3], (D, inner), jnp.float32) * 0.1,      # Linear(inner, dim)
        "out_b": jax.random.normal(keys[4], (D,), jnp.float32) * 0.1,
    }

    params = prepare_params(raw, heads=heads, dim_head=dim_head, dim=D)

    out = attention_forward(x, params, heads=heads, dim_head=dim_head)
    out = jax.block_until_ready(out)

    ref = reference_attention(x, raw, heads=heads, dim_head=dim_head)
    np.testing.assert_allclose(np.asarray(out), np.asarray(ref),
                               rtol=5e-2, atol=5e-2)

    print("KERNEL_OK")
</pallas_src>

<mosaic_0001>
module attributes {stable_mosaic.version = 11 : i64} {
  func.func @attention_kernel(%arg0: i32, %arg1: memref<2x8x128xbf16, #tpu.memory_space<vmem>>, %arg2: memref<128x384xbf16, #tpu.memory_space<vmem>>, %arg3: memref<1x384xf32, #tpu.memory_space<vmem>>, %arg4: memref<32x128xbf16, #tpu.memory_space<vmem>>, %arg5: memref<1x128xf32, #tpu.memory_space<vmem>>, %arg6: memref<2x8x128xf32, #tpu.memory_space<vmem>>) attributes {dimension_semantics = [#tpu.dimension_semantics<parallel>], iteration_bounds = array<i64: 1>, scalar_prefetch = 0 : i64, scratch_operands = 0 : i64, tpu.core_type = #tpu.core_type<tc>, window_params = [{transform_indices = @transform_0, window_bounds = array<i64: 2, 8, 128>}, {pipeline_mode = #tpu.pipeline_mode<synchronous>, transform_indices = @transform_1, window_bounds = array<i64: 128, 384>}, {pipeline_mode = #tpu.pipeline_mode<synchronous>, transform_indices = @transform_2, window_bounds = array<i64: 1, 384>}, {pipeline_mode = #tpu.pipeline_mode<synchronous>, transform_indices = @transform_3, window_bounds = array<i64: 32, 128>}, {pipeline_mode = #tpu.pipeline_mode<synchronous>, transform_indices = @transform_4, window_bounds = array<i64: 1, 128>}, {transform_indices = @transform_5, window_bounds = array<i64: 2, 8, 128>}]} {
    %c0 = arith.constant 0 : index
    %c0_0 = arith.constant 0 : index
    %c0_1 = arith.constant 0 : index
    %0 = vector.load %arg1[%c0, %c0_0, %c0_1] : memref<2x8x128xbf16, #tpu.memory_space<vmem>>, vector<2x8x128xbf16>
    %1 = vector.shape_cast %0 : vector<2x8x128xbf16> to vector<16x128xbf16>
    %c0_2 = arith.constant 0 : index
    %c0_3 = arith.constant 0 : index
    %2 = vector.load %arg2[%c0_2, %c0_3] : memref<128x384xbf16, #tpu.memory_space<vmem>>, vector<128x384xbf16>
    %cst = arith.constant dense<0.000000e+00> : vector<16x384xf32>
    %3 = tpu.matmul %1, %2, %cst {dimension_numbers = #tpu.dot_dimension_numbers<[1], [0], [0], [1], [0, 0, 1, 1], [], []>} : vector<16x128xbf16>, vector<128x384xbf16>, vector<16x384xf32> -> vector<16x384xf32>
    %c0_4 = arith.constant 0 : index
    %c0_5 = arith.constant 0 : index
    %4 = vector.load %arg3[%c0_4, %c0_5] : memref<1x384xf32, #tpu.memory_space<vmem>>, vector<1x384xf32>
    %5 = vector.broadcast %4 : vector<1x384xf32> to vector<16x384xf32>
    %6 = arith.addf %3, %5 : vector<16x384xf32>
    %7 = arith.truncf %6 : vector<16x384xf32> to vector<16x384xbf16>
    %8 = vector.extract_strided_slice %7 {offsets = [0, 0], sizes = [8, 8], strides = [1, 1]} : vector<16x384xbf16> to vector<8x8xbf16>
    %9 = vector.extract_strided_slice %7 {offsets = [0, 8], sizes = [8, 8], strides = [1, 1]} : vector<16x384xbf16> to vector<8x8xbf16>
    %10 = vector.extract_strided_slice %7 {offsets = [0, 16], sizes = [8, 8], strides = [1, 1]} : vector<16x384xbf16> to vector<8x8xbf16>
    %11 = vector.extract_strided_slice %7 {offsets = [0, 24], sizes = [8, 8], strides = [1, 1]} : vector<16x384xbf16> to vector<8x8xbf16>
    %12 = vector.extract_strided_slice %7 {offsets = [8, 0], sizes = [8, 8], strides = [1, 1]} : vector<16x384xbf16> to vector<8x8xbf16>
    %13 = vector.extract_strided_slice %7 {offsets = [8, 8], sizes = [8, 8], strides = [1, 1]} : vector<16x384xbf16> to vector<8x8xbf16>
    %14 = vector.extract_strided_slice %7 {offsets = [8, 16], sizes = [8, 8], strides = [1, 1]} : vector<16x384xbf16> to vector<8x8xbf16>
    %15 = vector.extract_strided_slice %7 {offsets = [8, 24], sizes = [8, 8], strides = [1, 1]} : vector<16x384xbf16> to vector<8x8xbf16>
    %16 = vector.shape_cast %8 : vector<8x8xbf16> to vector<1x8x8xbf16>
    %17 = vector.shape_cast %9 : vector<8x8xbf16> to vector<1x8x8xbf16>
    %18 = vector.shape_cast %10 : vector<8x8xbf16> to vector<1x8x8xbf16>
    %19 = vector.shape_cast %11 : vector<8x8xbf16> to vector<1x8x8xbf16>
    %20 = vector.shape_cast %12 : vector<8x8xbf16> to vector<1x8x8xbf16>
    %21 = vector.shape_cast %13 : vector<8x8xbf16> to vector<1x8x8xbf16>
    %22 = vector.shape_cast %14 : vector<8x8xbf16> to vector<1x8x8xbf16>
    %23 = vector.shape_cast %15 : vector<8x8xbf16> to vector<1x8x8xbf16>
    %24 = tpu.concatenate %16, %17, %18, %19, %20, %21, %22, %23 in 0 : vector<1x8x8xbf16>, vector<1x8x8xbf16>, vector<1x8x8xbf16>, vector<1x8x8xbf16>, vector<1x8x8xbf16>, vector<1x8x8xbf16>, vector<1x8x8xbf16>, vector<1x8x8xbf16> -> vector<8x8x8xbf16>
    %25 = vector.extract_strided_slice %7 {offsets = [0, 128], sizes = [8, 8], strides = [1, 1]} : vector<16x384xbf16> to vector<8x8xbf16>
    %26 = vector.extract_strided_slice %7 {offsets = [0, 136], sizes = [8, 8], strides = [1, 1]} : vector<16x384xbf16> to vector<8x8xbf16>
    %27 = vector.extract_strided_slice %7 {offsets = [0, 144], sizes = [8, 8], strides = [1, 1]} : vector<16x384xbf16> to vector<8x8xbf16>
    %28 = vector.extract_strided_slice %7 {offsets = [0, 152], sizes = [8, 8], strides = [1, 1]} : vector<16x384xbf16> to vector<8x8xbf16>
    %29 = vector.extract_strided_slice %7 {offsets = [8, 128], sizes = [8, 8], strides = [1, 1]} : vector<16x384xbf16> to vector<8x8xbf16>
    %30 = vector.extract_strided_slice %7 {offsets = [8, 136], sizes = [8, 8], strides = [1, 1]} : vector<16x384xbf16> to vector<8x8xbf16>
    %31 = vector.extract_strided_slice %7 {offsets = [8, 144], sizes = [8, 8], strides = [1, 1]} : vector<16x384xbf16> to vector<8x8xbf16>
    %32 = vector.extract_strided_slice %7 {offsets = [8, 152], sizes = [8, 8], strides = [1, 1]} : vector<16x384xbf16> to vector<8x8xbf16>
    %33 = vector.shape_cast %25 : vector<8x8xbf16> to vector<1x8x8xbf16>
    %34 = vector.shape_cast %26 : vector<8x8xbf16> to vector<1x8x8xbf16>
    %35 = vector.shape_cast %27 : vector<8x8xbf16> to vector<1x8x8xbf16>
    %36 = vector.shape_cast %28 : vector<8x8xbf16> to vector<1x8x8xbf16>
    %37 = vector.shape_cast %29 : vector<8x8xbf16> to vector<1x8x8xbf16>
    %38 = vector.shape_cast %30 : vector<8x8xbf16> to vector<1x8x8xbf16>
    %39 = vector.shape_cast %31 : vector<8x8xbf16> to vector<1x8x8xbf16>
    %40 = vector.shape_cast %32 : vector<8x8xbf16> to vector<1x8x8xbf16>
    %41 = tpu.concatenate %33, %34, %35, %36, %37, %38, %39, %40 in 0 : vector<1x8x8xbf16>, vector<1x8x8xbf16>, vector<1x8x8xbf16>, vector<1x8x8xbf16>, vector<1x8x8xbf16>, vector<1x8x8xbf16>, vector<1x8x8xbf16>, vector<1x8x8xbf16> -> vector<8x8x8xbf16>
    %42 = vector.extract_strided_slice %7 {offsets = [0, 256], sizes = [8, 8], strides = [1, 1]} : vector<16x384xbf16> to vector<8x8xbf16>
    %43 = vector.extract_strided_slice %7 {offsets = [0, 264], sizes = [8, 8], strides = [1, 1]} : vector<16x384xbf16> to vector<8x8xbf16>
    %44 = vector.extract_strided_slice %7 {offsets = [0, 272], sizes = [8, 8], strides = [1, 1]} : vector<16x384xbf16> to vector<8x8xbf16>
    %45 = vector.extract_strided_slice %7 {offsets = [0, 280], sizes = [8, 8], strides = [1, 1]} : vector<16x384xbf16> to vector<8x8xbf16>
    %46 = vector.extract_strided_slice %7 {offsets = [8, 256], sizes = [8, 8], strides = [1, 1]} : vector<16x384xbf16> to vector<8x8xbf16>
    %47 = vector.extract_strided_slice %7 {offsets = [8, 264], sizes = [8, 8], strides = [1, 1]} : vector<16x384xbf16> to vector<8x8xbf16>
    %48 = vector.extract_strided_slice %7 {offsets = [8, 272], sizes = [8, 8], strides = [1, 1]} : vector<16x384xbf16> to vector<8x8xbf16>
    %49 = vector.extract_strided_slice %7 {offsets = [8, 280], sizes = [8, 8], strides = [1, 1]} : vector<16x384xbf16> to vector<8x8xbf16>
    %50 = vector.shape_cast %42 : vector<8x8xbf16> to vector<1x8x8xbf16>
    %51 = vector.shape_cast %43 : vector<8x8xbf16> to vector<1x8x8xbf16>
    %52 = vector.shape_cast %44 : vector<8x8xbf16> to vector<1x8x8xbf16>
    %53 = vector.shape_cast %45 : vector<8x8xbf16> to vector<1x8x8xbf16>
    %54 = vector.shape_cast %46 : vector<8x8xbf16> to vector<1x8x8xbf16>
    %55 = vector.shape_cast %47 : vector<8x8xbf16> to vector<1x8x8xbf16>
    %56 = vector.shape_cast %48 : vector<8x8xbf16> to vector<1x8x8xbf16>
    %57 = vector.shape_cast %49 : vector<8x8xbf16> to vector<1x8x8xbf16>
    %58 = tpu.concatenate %50, %51, %52, %53, %54, %55, %56, %57 in 0 : vector<1x8x8xbf16>, vector<1x8x8xbf16>, vector<1x8x8xbf16>, vector<1x8x8xbf16>, vector<1x8x8xbf16>, vector<1x8x8xbf16>, vector<1x8x8xbf16>, vector<1x8x8xbf16> -> vector<8x8x8xbf16>
    %cst_6 = arith.constant dense<0.000000e+00> : vector<8x8x8xf32>
    %59 = tpu.matmul %24, %41, %cst_6 {dimension_numbers = #tpu.dot_dimension_numbers<[2], [2], [1], [1], [0, 0, 0, 1, 1, 1], [0], [0]>} : vector<8x8x8xbf16>, vector<8x8x8xbf16>, vector<8x8x8xf32> -> vector<8x8x8xf32>
    %cst_7 = arith.constant dense<0xFF800000> : vector<8x8xf32>
    %60 = vector.multi_reduction <maximumf>, %59, %cst_7 [2] : vector<8x8x8xf32> to vector<8x8xf32>
    %61 = vector.shape_cast %60 : vector<8x8xf32> to vector<8x8x1xf32>
    %62 = vector.broadcast %61 : vector<8x8x1xf32> to vector<8x8x8xf32>
    %63 = arith.subf %59, %62 : vector<8x8x8xf32>
    %64 = math.exp %63 : vector<8x8x8xf32>
    %cst_8 = arith.constant dense<0.000000e+00> : vector<8x8xf32>
    %65 = vector.multi_reduction <add>, %64, %cst_8 [2] : vector<8x8x8xf32> to vector<8x8xf32>
    %66 = vector.shape_cast %65 : vector<8x8xf32> to vector<8x8x1xf32>
    %67 = tpu.reciprocal %66 {approx = true} : vector<8x8x1xf32> -> vector<8x8x1xf32>
    %68 = vector.broadcast %67 : vector<8x8x1xf32> to vector<8x8x8xf32>
    %69 = arith.mulf %64, %68 : vector<8x8x8xf32>
    %70 = arith.truncf %69 : vector<8x8x8xf32> to vector<8x8x8xbf16>
    %cst_9 = arith.constant dense<0.000000e+00> : vector<8x8x8xf32>
    %71 = tpu.matmul %70, %58, %cst_9 {dimension_numbers = #tpu.dot_dimension_numbers<[2], [1], [1], [2], [0, 0, 0, 1, 1, 2], [0], [0]>} : vector<8x8x8xbf16>, vector<8x8x8xbf16>, vector<8x8x8xf32> -> vector<8x8x8xf32>
    %72 = vector.extract_strided_slice %71 {offsets = [0, 0, 0], sizes = [1, 8, 8], strides = [1, 1, 1]} : vector<8x8x8xf32> to vector<1x8x8xf32>
    %73 = vector.shape_cast %72 : vector<1x8x8xf32> to vector<8x8xf32>
    %74 = vector.extract_strided_slice %71 {offsets = [1, 0, 0], sizes = [1, 8, 8], strides = [1, 1, 1]} : vector<8x8x8xf32> to vector<1x8x8xf32>
    %75 = vector.shape_cast %74 : vector<1x8x8xf32> to vector<8x8xf32>
    %76 = vector.extract_strided_slice %71 {offsets = [2, 0, 0], sizes = [1, 8, 8], strides = [1, 1, 1]} : vector<8x8x8xf32> to vector<1x8x8xf32>
    %77 = vector.shape_cast %76 : vector<1x8x8xf32> to vector<8x8xf32>
    %78 = vector.extract_strided_slice %71 {offsets = [3, 0, 0], sizes = [1, 8, 8], strides = [1, 1, 1]} : vector<8x8x8xf32> to vector<1x8x8xf32>
    %79 = vector.shape_cast %78 : vector<1x8x8xf32> to vector<8x8xf32>
    %80 = tpu.concatenate %73, %75, %77, %79 in 1 : vector<8x8xf32>, vector<8x8xf32>, vector<8x8xf32>, vector<8x8xf32> -> vector<8x32xf32>
    %81 = vector.extract_strided_slice %71 {offsets = [4, 0, 0], sizes = [1, 8, 8], strides = [1, 1, 1]} : vector<8x8x8xf32> to vector<1x8x8xf32>
    %82 = vector.shape_cast %81 : vector<1x8x8xf32> to vector<8x8xf32>
    %83 = vector.extract_strided_slice %71 {offsets = [5, 0, 0], sizes = [1, 8, 8], strides = [1, 1, 1]} : vector<8x8x8xf32> to vector<1x8x8xf32>
    %84 = vector.shape_cast %83 : vector<1x8x8xf32> to vector<8x8xf32>
    %85 = vector.extract_strided_slice %71 {offsets = [6, 0, 0], sizes = [1, 8, 8], strides = [1, 1, 1]} : vector<8x8x8xf32> to vector<1x8x8xf32>
    %86 = vector.shape_cast %85 : vector<1x8x8xf32> to vector<8x8xf32>
    %87 = vector.extract_strided_slice %71 {offsets = [7, 0, 0], sizes = [1, 8, 8], strides = [1, 1, 1]} : vector<8x8x8xf32> to vector<1x8x8xf32>
    %88 = vector.shape_cast %87 : vector<1x8x8xf32> to vector<8x8xf32>
    %89 = tpu.concatenate %82, %84, %86, %88 in 1 : vector<8x8xf32>, vector<8x8xf32>, vector<8x8xf32>, vector<8x8xf32> -> vector<8x32xf32>
    %90 = tpu.concatenate %80, %89 in 0 : vector<8x32xf32>, vector<8x32xf32> -> vector<16x32xf32>
    %91 = arith.truncf %90 : vector<16x32xf32> to vector<16x32xbf16>
    %c0_10 = arith.constant 0 : index
    %c0_11 = arith.constant 0 : index
    %92 = vector.load %arg4[%c0_10, %c0_11] : memref<32x128xbf16, #tpu.memory_space<vmem>>, vector<32x128xbf16>
    %cst_12 = arith.constant dense<0.000000e+00> : vector<16x128xf32>
    %93 = tpu.matmul %91, %92, %cst_12 {dimension_numbers = #tpu.dot_dimension_numbers<[1], [0], [0], [1], [0, 0, 1, 1], [], []>} : vector<16x32xbf16>, vector<32x128xbf16>, vector<16x128xf32> -> vector<16x128xf32>
    %c0_13 = arith.constant 0 : index
    %c0_14 = arith.constant 0 : index
    %94 = vector.load %arg5[%c0_13, %c0_14] : memref<1x128xf32, #tpu.memory_space<vmem>>, vector<1x128xf32>
    %95 = vector.broadcast %94 : vector<1x128xf32> to vector<16x128xf32>
    %96 = arith.addf %93, %95 : vector<16x128xf32>
    %97 = vector.shape_cast %96 : vector<16x128xf32> to vector<2x8x128xf32>
    %c0_15 = arith.constant 0 : index
    %c0_16 = arith.constant 0 : index
    %c0_17 = arith.constant 0 : index
    %98 = vector.load %arg6[%c0_15, %c0_16, %c0_17] : memref<2x8x128xf32, #tpu.memory_space<vmem>>, vector<2x8x128xf32>
    tpu.vector_store %arg6[%c0_15, %c0_16, %c0_17], %97 {strides = array<i32>} : memref<2x8x128xf32, #tpu.memory_space<vmem>>, vector<2x8x128xf32>,
    return
  }
  func.func @transform_0(%arg0: i32) -> (i32, i32, i32) {
    %c0_i32 = arith.constant 0 : i32
    %c0_i32_0 = arith.constant 0 : i32
    %c0_i32_1 = arith.constant 0 : i32
    return %arg0, %c0_i32, %c0_i32_0 : i32, i32, i32
  }
  func.func @transform_1(%arg0: i32) -> (i32, i32) {
    %c0_i32 = arith.constant 0 : i32
    %c0_i32_0 = arith.constant 0 : i32
    %c0_i32_1 = arith.constant 0 : i32
    return %c0_i32, %c0_i32_0 : i32, i32
  }
  func.func @transform_2(%arg0: i32) -> (i32, i32) {
    %c0_i32 = arith.constant 0 : i32
    %c0_i32_0 = arith.constant 0 : i32
    %c0_i32_1 = arith.constant 0 : i32
    return %c0_i32, %c0_i32_0 : i32, i32
  }
  func.func @transform_3(%arg0: i32) -> (i32, i32) {
    %c0_i32 = arith.constant 0 : i32
    %c0_i32_0 = arith.constant 0 : i32
    %c0_i32_1 = arith.constant 0 : i32
    return %c0_i32, %c0_i32_0 : i32, i32
  }
  func.func @transform_4(%arg0: i32) -> (i32, i32) {
    %c0_i32 = arith.constant 0 : i32
    %c0_i32_0 = arith.constant 0 : i32
    %c0_i32_1 = arith.constant 0 : i32
    return %c0_i32, %c0_i32_0 : i32, i32
  }
  func.func @transform_5(%arg0: i32) -> (i32, i32, i32) {
    %c0_i32 = arith.constant 0 : i32
    %c0_i32_0 = arith.constant 0 : i32
    %c0_i32_1 = arith.constant 0 : i32
    return %arg0, %c0_i32, %c0_i32_0 : i32, i32, i32
  }
}

</mosaic_0001>

<llo_original>
// kernel: tpu_custom_call.1
$region0: #{tpu_custom_call.1}
  #allocation0 [shape = 'u32[]', space=smem, size = 0x4, offset = 0x4, fixed_abs, tag = 'smem constant byte address 0x4 - core index']
  #allocation1 [shape = 'u32[144,128]{1,0:T(1,128)}', space=vmem, size = 0x12000, scoped, tag = 'internal scratch']
  %s0 = inlined_call_operand.hbm [shape: bf16[2,8,128], index: 0, kind: input, shape index: {}]
  %s1 = inlined_call_operand.hbm [shape: bf16[128,384], index: 1, kind: input, shape index: {}]
  %s2 = inlined_call_operand.vmem [shape: f32[1,384], index: 2, kind: input, shape index: {}]
  %s3 = inlined_call_operand.hbm [shape: bf16[32,128], index: 3, kind: input, shape index: {}]
  %s4 = inlined_call_operand.vmem [shape: f32[1,128], index: 4, kind: input, shape index: {}]
  %s5 = inlined_call_operand.hbm [shape: f32[2,8,128], index: 5, kind: output, shape index: {}]
  %s6 = sld [smem:[#allocation0]]
  $region42: #{tpu_custom_call.1} parent=0
    _
  %s8 = ssub.s32 1, %s6
  %s9 = scalar_select 0, %s8, %s6
  $region1: #{tpu_custom_call.1} parent=0
    #allocation2 [shape = 'u8[4096]{0}', space=vmem, size = 0x1000, scoped, tag = 'input window, operand 0, single buffered']
    #allocation3 [shape = 's32[1]{0}', space=sflag, size = 0x4, scoped, tag = 'scoped memory for tpu_custom_call.1']
    #allocation4 [shape = 's32[1]{0}', space=sflag, size = 0x4, scoped, tag = 'scoped memory for tpu_custom_call.1']
    #allocation5 [shape = 'u8[98304]{0}', space=vmem, size = 0x18000, scoped, tag = 'input window, operand 1, single buffered']
    #allocation6 [shape = 's32[1]{0}', space=sflag, size = 0x4, scoped, tag = 'scoped memory for tpu_custom_call.1']
    #allocation7 [shape = 'u8[8192]{0}', space=vmem, size = 0x2000, scoped, tag = 'input window, operand 3, single buffered']
    #allocation8 [shape = 'u8[8192]{0}', space=vmem, size = 0x2000, scoped, tag = 'output window, operand 0, single buffered']
    %10 = vsyncpa [#allocation3], 0
    %11 = vsyncpa [#allocation6], 0
    %12 = vsyncpa [#allocation4], 0
    // Predicated region
    $region2: #{tpu_custom_call.1} parent=1 // pred_check
      _
    $region3: #{tpu_custom_call.1} parent=1 // pred_check_branch
      %14 = sbr.rel (0) target = $region5
    $region4: #{tpu_custom_call.1} parent=1 // pred_region
      %s16 = ssub.s32 128, 128
      %17 = vsyncadd [#allocation3], %s16
      %s18 = sshll.u32 [#allocation2], 4
      %s19 = int_to_ptr.vmem [resolvable:$true] %s18
      %24 = dma.hbm_to_vmem [thread:$0]  %s0, 128, %s19, [#allocation3], 64, 64, 4
    $region5: #{tpu_custom_call.1} parent=1 // pred_fallthru
      _
    // Predicated region
    $region6: #{tpu_custom_call.1} parent=1 // pred_check
      _
    $region7: #{tpu_custom_call.1} parent=1 // pred_check_branch
      %26 = sbr.rel (0) target = $region9
    $region8: #{tpu_custom_call.1} parent=1 // pred_region
      %s28 = ssub.s32 3072, 3072
      %29 = vsyncadd [#allocation6], %s28
      %s30 = sshll.u32 [#allocation5], 4
      %s31 = int_to_ptr.vmem [resolvable:$true] %s30
      %36 = dma.hbm_to_vmem [thread:$0]  %s1, 3072, %s31, [#allocation6], 192, 192, 12
    $region9: #{tpu_custom_call.1} parent=1 // pred_fallthru
      _
    // Predicated region
    $region10: #{tpu_custom_call.1} parent=1 // pred_check
      _
    $region11: #{tpu_custom_call.1} parent=1 // pred_check_branch
      %38 = sbr.rel (0) target = $region13
    $region12: #{tpu_custom_call.1} parent=1 // pred_region
      _
    $region13: #{tpu_custom_call.1} parent=1 // pred_fallthru
      _
    // Predicated region
    $region14: #{tpu_custom_call.1} parent=1 // pred_check
      _
    $region15: #{tpu_custom_call.1} parent=1 // pred_check_branch
      %40 = sbr.rel (0) target = $region17
    $region16: #{tpu_custom_call.1} parent=1 // pred_region
      %s42 = ssub.s32 256, 256
      %43 = vsyncadd [#allocation6], %s42
      %s44 = sshll.u32 [#allocation7], 4
      %s45 = int_to_ptr.vmem [resolvable:$true] %s44
      %50 = dma.hbm_to_vmem [thread:$0]  %s3, 256, %s45, [#allocation6], 64, 64, 4
    $region17: #{tpu_custom_call.1} parent=1 // pred_fallthru
      _
    // Predicated region
    $region18: #{tpu_custom_call.1} parent=1 // pred_check
      _
    $region19: #{tpu_custom_call.1} parent=1 // pred_check_branch
      %52 = sbr.rel (0) target = $region21
    $region20: #{tpu_custom_call.1} parent=1 // pred_region
      _
    $region21: #{tpu_custom_call.1} parent=1 // pred_fallthru
      _
    // Predicated region
    $region22: #{tpu_custom_call.1} parent=1 // pred_check
      _
    $region23: #{tpu_custom_call.1} parent=1 // pred_check_branch
      %54 = sbr.rel (0) target = $region25
    $region24: #{tpu_custom_call.1} parent=1 // pred_region
      %55 = dma.done [#allocation3], 128
    $region25: #{tpu_custom_call.1} parent=1 // pred_fallthru
      _
    // Predicated region
    $region26: #{tpu_custom_call.1} parent=1 // pred_check
      _
    $region27: #{tpu_custom_call.1} parent=1 // pred_check_branch
      %57 = sbr.rel (0) target = $region29
    $region28: #{tpu_custom_call.1} parent=1 // pred_region
      %58 = dma.done [#allocation6], 3072
    $region29: #{tpu_custom_call.1} parent=1 // pred_fallthru
      _
    // Predicated region
    $region30: #{tpu_custom_call.1} parent=1 // pred_check
      _
    $region31: #{tpu_custom_call.1} parent=1 // pred_check_branch
      %60 = sbr.rel (0) target = $region33
    $region32: #{tpu_custom_call.1} parent=1 // pred_region
      %61 = dma.done [#allocation6], 256
    $region33: #{tpu_custom_call.1} parent=1 // pred_fallthru
      _
    %v63 = vld [vmem:[#allocation2] sm:$0xf]
    %v64 = vld [vmem:[#allocation2 + $0x4] sm:$0xf]
    %v65 = vld [vmem:[#allocation5] sm:$0xff]
    %v66 = vld [vmem:[#allocation5 + $0x8] sm:$0xf]
    %v67 = vld [vmem:[#allocation5 + $0xc] sm:$0xff]
    %v68 = vld [vmem:[#allocation5 + $0x14] sm:$0xf]
    %v69 = vld [vmem:[#allocation5 + $0x18] sm:$0xff]
    %v70 = vld [vmem:[#allocation5 + $0x20] sm:$0xf]
    %v71 = vld [vmem:[#allocation5 + $0x24] sm:$0xff]
    %v72 = vld [vmem:[#allocation5 + $0x2c] sm:$0xf]
    %v73 = vld [vmem:[#allocation5 + $0x30] sm:$0xff]
    %v74 = vld [vmem:[#allocation5 + $0x38] sm:$0xf]
    %v75 = vld [vmem:[#allocation5 + $0x3c] sm:$0xff]
    %v76 = vld [vmem:[#allocation5 + $0x44] sm:$0xf]
    %v77 = vld [vmem:[#allocation5 + $0x48] sm:$0xff]
    %v78 = vld [vmem:[#allocation5 + $0x50] sm:$0xf]
    %v79 = vld [vmem:[#allocation5 + $0x54] sm:$0xff]
    %v80 = vld [vmem:[#allocation5 + $0x5c] sm:$0xf]
    %v81 = vld [vmem:[#allocation5 + $0x60] sm:$0xff]
    %v82 = vld [vmem:[#allocation5 + $0x68] sm:$0xf]
    %v83 = vld [vmem:[#allocation5 + $0x6c] sm:$0xff]
    %v84 = vld [vmem:[#allocation5 + $0x74] sm:$0xf]
    %v85 = vld [vmem:[#allocation5 + $0x78] sm:$0xff]
    %v86 = vld [vmem:[#allocation5 + $0x80] sm:$0xf]
    %v87 = vld [vmem:[#allocation5 + $0x84] sm:$0xff]
    %v88 = vld [vmem:[#allocation5 + $0x8c] sm:$0xf]
    %v89 = vld [vmem:[#allocation5 + $0x90] sm:$0xff]
    %v90 = vld [vmem:[#allocation5 + $0x98] sm:$0xf]
    %v91 = vld [vmem:[#allocation5 + $0x9c] sm:$0xff]
    %v92 = vld [vmem:[#allocation5 + $0xa4] sm:$0xf]
    %v93 = vld [vmem:[#allocation5 + $0xa8] sm:$0xff]
    %v94 = vld [vmem:[#allocation5 + $0xb0] sm:$0xf]
    %v95 = vld [vmem:[#allocation5 + $0xb4] sm:$0xff]
    %v96 = vld [vmem:[#allocation5 + $0xbc] sm:$0xf]
    %v97 = vld [vmem:[%s2] sm:$0x7]
    %v99 = vlaneseq
    %v100 = vshrl.u32 %v99, 7
    %v101 = vsub.s32 0, %v100
    %v102 = vrot.slane %v97, %v101
    %v103 = vlaneseq
    %v104 = vshrl.u32 %v103, 7
    %v105 = vsub.s32 1, %v104
    %v106 = vrot.slane %v97, %v105
    %v107 = vlaneseq
    %v108 = vshrl.u32 %v107, 7
    %v109 = vsub.s32 2, %v108
    %v110 = vrot.slane %v97, %v109
    %v116 = vunpack.c.l.b16 %v63
    %v117 = vunpack.c.l.b16 %v64
    %v118 = vpack.c.b16 %v117, %v116
    %v152 = vunpack.c.l.b16 %v65
    %v153 = vunpack.c.h.b16 %v65
    %v154 = vunpack.c.l.b16 %v66
    %v155 = vunpack.c.l.b16 %v67
    %v156 = vunpack.c.h.b16 %v67
    %v157 = vunpack.c.l.b16 %v68
    %v158 = vunpack.c.l.b16 %v69
    %v159 = vunpack.c.h.b16 %v69
    %v160 = vunpack.c.l.b16 %v70
    %v161 = vunpack.c.l.b16 %v71
    %v162 = vunpack.c.h.b16 %v71
    %v163 = vunpack.c.l.b16 %v72
    %v164 = vunpack.c.l.b16 %v73
    %v165 = vunpack.c.h.b16 %v73
    %v166 = vunpack.c.l.b16 %v74
    %v167 = vunpack.c.l.b16 %v75
    %v168 = vunpack.c.h.b16 %v75
    %v169 = vunpack.c.l.b16 %v76
    %v170 = vunpack.c.l.b16 %v77
    %v171 = vunpack.c.h.b16 %v77
    %v172 = vunpack.c.l.b16 %v78
    %v173 = vunpack.c.l.b16 %v79
    %v174 = vunpack.c.h.b16 %v79
    %v175 = vunpack.c.l.b16 %v80
    %v176 = vunpack.c.l.b16 %v81
    %v177 = vunpack.c.h.b16 %v81
    %v178 = vunpack.c.l.b16 %v82
    %v179 = vunpack.c.l.b16 %v83
    %v180 = vunpack.c.h.b16 %v83
    %v181 = vunpack.c.l.b16 %v84
    %v182 = vunpack.c.l.b16 %v85
    %v183 = vunpack.c.h.b16 %v85
    %v184 = vunpack.c.l.b16 %v86
    %v185 = vunpack.c.l.b16 %v87
    %v186 = vunpack.c.h.b16 %v87
    %v187 = vunpack.c.l.b16 %v88
    %v188 = vunpack.c.l.b16 %v89
    %v189 = vunpack.c.h.b16 %v89
    %v190 = vunpack.c.l.b16 %v90
    %v191 = vunpack.c.l.b16 %v91
    %v192 = vunpack.c.h.b16 %v91
    %v193 = vunpack.c.l.b16 %v92
    %v194 = vunpack.c.l.b16 %v93
    %v195 = vunpack.c.h.b16 %v93
    %v196 = vunpack.c.l.b16 %v94
    %v197 = vunpack.c.l.b16 %v95
    %v198 = vunpack.c.h.b16 %v95
    %v199 = vunpack.c.l.b16 %v96
    %v200 = vpack.c.b16 %v155, %v152
    %v201 = vpack.c.b16 %v156, %v153
    %v202 = vpack.c.b16 %v157, %v154
    %v203 = vpack.c.b16 %v161, %v158
    %v204 = vpack.c.b16 %v162, %v159
    %v205 = vpack.c.b16 %v163, %v160
    %v206 = vpack.c.b16 %v167, %v164
    %v207 = vpack.c.b16 %v168, %v165
    %v208 = vpack.c.b16 %v169, %v166
    %v209 = vpack.c.b16 %v173, %v170
    %v210 = vpack.c.b16 %v174, %v171
    %v211 = vpack.c.b16 %v175, %v172
    %v212 = vpack.c.b16 %v179, %v176
    %v213 = vpack.c.b16 %v180, %v177
    %v214 = vpack.c.b16 %v181, %v178
    %v215 = vpack.c.b16 %v185, %v182
    %v216 = vpack.c.b16 %v186, %v183
    %v217 = vpack.c.b16 %v187, %v184
    %v218 = vpack.c.b16 %v191, %v188
    %v219 = vpack.c.b16 %v192, %v189
    %v220 = vpack.c.b16 %v193, %v190
    %v221 = vpack.c.b16 %v197, %v194
    %v222 = vpack.c.b16 %v198, %v195
    %v223 = vpack.c.b16 %v199, %v196
    %248 = vmatprep.subr.bf16.mxu0 %v222
    %249 = vmatpush1.bf16.msra.mxu0 %v221
    %250 = vmatprep.subr.bf16.mxu0 %v219
    %251 = vmatpush1.bf16.msra.mxu0 %v218
    %252 = vmatprep.subr.bf16.mxu0 %v216
    %253 = vmatpush1.bf16.msra.mxu0 %v215
    %254 = vmatprep.subr.bf16.mxu0 %v213
    %255 = vmatpush1.bf16.msra.mxu0 %v212
    %256 = vmatprep.subr.bf16.mxu0 %v210
    %257 = vmatpush1.bf16.msra.mxu0 %v209
    %258 = vmatprep.subr.bf16.mxu0 %v207
    %259 = vmatpush1.bf16.msra.mxu0 %v206
    %260 = vmatprep.subr.bf16.mxu0 %v204
    %261 = vmatpush1.bf16.msra.mxu0 %v203
    %262 = vmatprep.subr.bf16.mxu0 %v201
    %263 = vmatpush1.bf16.msra.mxu0 %v200
    %264 = vmatprep.subr.bf16.mxu0 0
    %265 = vmatpush2.bf16.msra.mxu0 0
    %266 = vmatprep.subr.bf16.mxu0 0
    %267 = vmatpush2.bf16.msra.mxu0 0
    %268 = vmatprep.subr.bf16.mxu0 0
    %269 = vmatpush2.bf16.msra.mxu0 0
    %270 = vmatprep.subr.bf16.mxu0 0
    %271 = vmatpush2.bf16.msra.mxu0 0
    %272 = vmatprep.subr.bf16.mxu0 0
    %273 = vmatpush2.bf16.msra.mxu0 0
    %274 = vmatprep.subr.bf16.mxu0 0
    %275 = vmatpush2.bf16.msra.mxu0 0
    %276 = vmatprep.subr.bf16.mxu0 0
    %277 = vmatpush2.bf16.msra.mxu0 0
    %278 = vmatprep.subr.bf16.mxu0 0
    %279 = vmatpush2.bf16.msra.mxu0 0
    %280 = vmatprep.mubr.bf16.mxu0 0
    %281 = vmatmul.mubr.bf16.gmra.mxu0 %v118
    %v282 = vpop.f32.mrf.mxu0
    %v283 = vadd.f32 %v102, %v282
    %v284 = vpop.f32.mrf.mxu0
    %v285 = vadd.f32 %v106, %v284
    %v286 = vpop.f32.mrf.mxu0
    %v287 = vadd.f32 %v102, %v286
    %v288 = vpop.f32.mrf.mxu0
    %v289 = vadd.f32 %v106, %v288
    %290 = vdwg.mxu0
    %291 = vmatprep.subr.bf16.mxu0 0
    %292 = vmatpush1.bf16.msra.mxu0 %v223
    %293 = vmatprep.subr.bf16.mxu0 0
    %294 = vmatpush1.bf16.msra.mxu0 %v220
    %295 = vmatprep.subr.bf16.mxu0 0
    %296 = vmatpush1.bf16.msra.mxu0 %v217
    %297 = vmatprep.subr.bf16.mxu0 0
    %298 = vmatpush1.bf16.msra.mxu0 %v214
    %299 = vmatprep.subr.bf16.mxu0 0
    %300 = vmatpush1.bf16.msra.mxu0 %v211
    %301 = vmatprep.subr.bf16.mxu0 0
    %302 = vmatpush1.bf16.msra.mxu0 %v208
    %303 = vmatprep.subr.bf16.mxu0 0
    %304 = vmatpush1.bf16.msra.mxu0 %v205
    %305 = vmatprep.subr.bf16.mxu0 0
    %306 = vmatpush1.bf16.msra.mxu0 %v202
    %307 = vmatprep.subr.bf16.mxu0 0
    %308 = vmatpush2.bf16.msra.mxu0 0
    %309 = vmatprep.subr.bf16.mxu0 0
    %310 = vmatpush2.bf16.msra.mxu0 0
    %311 = vmatprep.subr.bf16.mxu0 0
    %312 = vmatpush2.bf16.msra.mxu0 0
    %313 = vmatprep.subr.bf16.mxu0 0
    %314 = vmatpush2.bf16.msra.mxu0 0
    %315 = vmatprep.subr.bf16.mxu0 0
    %316 = vmatpush2.bf16.msra.mxu0 0
    %317 = vmatprep.subr.bf16.mxu0 0
    %318 = vmatpush2.bf16.msra.mxu0 0
    %319 = vmatprep.subr.bf16.mxu0 0
    %320 = vmatpush2.bf16.msra.mxu0 0
    %321 = vmatprep.subr.bf16.mxu0 0
    %322 = vmatpush2.bf16.msra.mxu0 0
    %323 = vmatprep.mubr.bf16.mxu0 0
    %324 = vmatmul.mubr.bf16.gmra.mxu0 %v118
    %v325 = vpop.f32.mrf.mxu0
    %v326 = vadd.f32 %v110, %v325
    %v327 = vpop.f32.mrf.mxu0
    %v328 = vpop.f32.mrf.mxu0
    %v329 = vadd.f32 %v110, %v328
    %v330 = vpop.f32.mrf.mxu0
    %331 = vdwg.mxu0
    %v332 = vpack.c.bf16 %v287, %v283
    %v333 = vpack.c.bf16 %v289, %v285
    %v334 = vpack.c.bf16 %v329, %v326
    %336 = vrot.lane.b32.xlu0 %v332, 120
    %v337 = vpop.permute.xlu0 %336
    %338 = vrot.lane.b32.xlu0 %v332, 112
    %v339 = vpop.permute.xlu0 %338
    %340 = vrot.lane.b32.xlu0 %v332, 104
    %v341 = vpop.permute.xlu0 %340
    %v342 = vrot.slane %v332, 4
    %343 = vrot.lane.b32.xlu0 %v342, 120
    %v344 = vpop.permute.xlu0 %343
    %345 = vrot.lane.b32.xlu0 %v342, 112
    %v346 = vpop.permute.xlu0 %345
    %347 = vrot.lane.b32.xlu0 %v342, 104
    %v348 = vpop.permute.xlu0 %347
    %350 = vrot.lane.b32.xlu0 %v333, 120
    %v351 = vpop.permute.xlu0 %350
    %352 = vrot.lane.b32.xlu0 %v333, 112
    %v353 = vpop.permute.xlu0 %352
    %354 = vrot.lane.b32.xlu0 %v333, 104
    %v355 = vpop.permute.xlu0 %354
    %v356 = vrot.slane %v333, 4
    %357 = vrot.lane.b32.xlu0 %v356, 120
    %v358 = vpop.permute.xlu0 %357
    %359 = vrot.lane.b32.xlu0 %v356, 112
    %v360 = vpop.permute.xlu0 %359
    %361 = vrot.lane.b32.xlu0 %v356, 104
    %v362 = vpop.permute.xlu0 %361
    %364 = vrot.lane.b32.xlu0 %v334, 120
    %v365 = vpop.permute.xlu0 %364
    %366 = vrot.lane.b32.xlu0 %v334, 112
    %v367 = vpop.permute.xlu0 %366
    %368 = vrot.lane.b32.xlu0 %v334, 104
    %v369 = vpop.permute.xlu0 %368
    %v370 = vrot.slane %v334, 4
    %371 = vrot.lane.b32.xlu0 %v370, 120
    %v372 = vpop.permute.xlu0 %371
    %373 = vrot.lane.b32.xlu0 %v370, 112
    %v374 = vpop.permute.xlu0 %373
    %375 = vrot.lane.b32.xlu0 %v370, 104
    %v376 = vpop.permute.xlu0 %375
    %vm377 = vcmask 64512
    %v379 = vsel %vm377, %v332, 0
    %v382 = vsel %vm377, %v333, 0
    %384 = vmatprep.subr.bf16.mxu0 0
    %385 = vmatpush1.bf16.xpose.msra.mxu0 0
    %386 = vmatprep.subr.bf16.mxu0 0
    %387 = vmatpush1.bf16.xpose.msra.mxu0 0
    %388 = vmatprep.subr.bf16.mxu0 0
    %389 = vmatpush1.bf16.xpose.msra.mxu0 0
    %390 = vmatprep.subr.bf16.mxu0 0
    %391 = vmatpush1.bf16.xpose.msra.mxu0 0
    %392 = vmatprep.subr.bf16.mxu0 0
    %393 = vmatpush1.bf16.xpose.msra.mxu0 0
    %394 = vmatprep.subr.bf16.mxu0 0
    %395 = vmatpush1.bf16.xpose.msra.mxu0 0
    %396 = vmatprep.subr.bf16.mxu0 0
    %397 = vmatpush1.bf16.xpose.msra.mxu0 0
    %398 = vmatprep.subr.bf16.mxu0 0
    %399 = vmatpush1.bf16.xpose.msra.mxu0 %v382
    %400 = vmatprep.subr.bf16.mxu0 0
    %401 = vmatpush2.bf16.xpose.msra.mxu0 0
    %402 = vmatprep.subr.bf16.mxu0 0
    %403 = vmatpush2.bf16.xpose.msra.mxu0 0
    %404 = vmatprep.subr.bf16.mxu0 0
    %405 = vmatpush2.bf16.xpose.msra.mxu0 0
    %406 = vmatprep.subr.bf16.mxu0 0
    %407 = vmatpush2.bf16.xpose.msra.mxu0 0
    %408 = vmatprep.subr.bf16.mxu0 0
    %409 = vmatpush2.bf16.xpose.msra.mxu0 0
    %410 = vmatprep.subr.bf16.mxu0 0
    %411 = vmatpush2.bf16.xpose.msra.mxu0 0
    %412 = vmatprep.subr.bf16.mxu0 0
    %413 = vmatpush2.bf16.xpose.msra.mxu0 0
    %414 = vmatprep.subr.bf16.mxu0 0
    %415 = vmatpush2.bf16.xpose.msra.mxu0 0
    %416 = vmatprep.mubr.bf16.mxu0 0
    %417 = vmatmul.mubr.bf16.gmra.mxu0 %v379
    %v418 = vpop.f32.mrf.mxu0
    %v419 = vadd.f32 0.0, %v418
    %v420 = vpop.f32.mrf.mxu0
    %v421 = vpop.f32.mrf.mxu0
    %v422 = vpop.f32.mrf.mxu0
    %423 = vdwg.mxu0
    %v425 = vsel %vm377, %v337, 0
    %v428 = vsel %vm377, %v351, 0
    %430 = vmatprep.subr.bf16.mxu0 0
    %431 = vmatpush1.bf16.xpose.msra.mxu0 0
    %432 = vmatprep.subr.bf16.mxu0 0
    %433 = vmatpush1.bf16.xpose.msra.mxu0 0
    %434 = vmatprep.subr.bf16.mxu0 0
    %435 = vmatpush1.bf16.xpose.msra.mxu0 0
    %436 = vmatprep.subr.bf16.mxu0 0
    %437 = vmatpush1.bf16.xpose.msra.mxu0 0
    %438 = vmatprep.subr.bf16.mxu0 0
    %439 = vmatpush1.bf16.xpose.msra.mxu0 0
    %440 = vmatprep.subr.bf16.mxu0 0
    %441 = vmatpush1.bf16.xpose.msra.mxu0 0
    %442 = vmatprep.subr.bf16.mxu0 0
    %443 = vmatpush1.bf16.xpose.msra.mxu0 0
    %444 = vmatprep.subr.bf16.mxu0 0
    %445 = vmatpush1.bf16.xpose.msra.mxu0 %v428
    %446 = vmatprep.subr.bf16.mxu0 0
    %447 = vmatpush2.bf16.xpose.msra.mxu0 0
    %448 = vmatprep.subr.bf16.mxu0 0
    %449 = vmatpush2.bf16.xpose.msra.mxu0 0
    %450 = vmatprep.subr.bf16.mxu0 0
    %451 = vmatpush2.bf16.xpose.msra.mxu0 0
    %452 = vmatprep.subr.bf16.mxu0 0
    %453 = vmatpush2.bf16.xpose.msra.mxu0 0
    %454 = vmatprep.subr.bf16.mxu0 0
    %455 = vmatpush2.bf16.xpose.msra.mxu0 0
    %456 = vmatprep.subr.bf16.mxu0 0
    %457 = vmatpush2.bf16.xpose.msra.mxu0 0
    %458 = vmatprep.subr.bf16.mxu0 0
    %459 = vmatpush2.bf16.xpose.msra.mxu0 0
    %460 = vmatprep.subr.bf16.mxu0 0
    %461 = vmatpush2.bf16.xpose.msra.mxu0 0
    %462 = vmatprep.mubr.bf16.mxu0 0
    %463 = vmatmul.mubr.bf16.gmra.mxu0 %v425
    %v464 = vpop.f32.mrf.mxu0
    %v465 = vadd.f32 0.0, %v464
    %v466 = vpop.f32.mrf.mxu0
    %v467 = vpop.f32.mrf.mxu0
    %v468 = vpop.f32.mrf.mxu0
    %469 = vdwg.mxu0
    %v471 = vsel %vm377, %v339, 0
    %v474 = vsel %vm377, %v353, 0
    %476 = vmatprep.subr.bf16.mxu0 0
    %477 = vmatpush1.bf16.xpose.msra.mxu0 0
    %478 = vmatprep.subr.bf16.mxu0 0
    %479 = vmatpush1.bf16.xpose.msra.mxu0 0
    %480 = vmatprep.subr.bf16.mxu0 0
    %481 = vmatpush1.bf16.xpose.msra.mxu0 0
    %482 = vmatprep.subr.bf16.mxu0 0
    %483 = vmatpush1.bf16.xpose.msra.mxu0 0
    %484 = vmatprep.subr.bf16.mxu0 0
    %485 = vmatpush1.bf16.xpose.msra.mxu0 0
    %486 = vmatprep.subr.bf16.mxu0 0
    %487 = vmatpush1.bf16.xpose.msra.mxu0 0
    %488 = vmatprep.subr.bf16.mxu0 0
    %489 = vmatpush1.bf16.xpose.msra.mxu0 0
    %490 = vmatprep.subr.bf16.mxu0 0
    %491 = vmatpush1.bf16.xpose.msra.mxu0 %v474
    %492 = vmatprep.subr.bf16.mxu0 0
    %493 = vmatpush2.bf16.xpose.msra.mxu0 0
    %494 = vmatprep.subr.bf16.mxu0 0
    %495 = vmatpush2.bf16.xpose.msra.mxu0 0
    %496 = vmatprep.subr.bf16.mxu0 0
    %497 = vmatpush2.bf16.xpose.msra.mxu0 0
    %498 = vmatprep.subr.bf16.mxu0 0
    %499 = vmatpush2.bf16.xpose.msra.mxu0 0
    %500 = vmatprep.subr.bf16.mxu0 0
    %501 = vmatpush2.bf16.xpose.msra.mxu0 0
    %502 = vmatprep.subr.bf16.mxu0 0
    %503 = vmatpush2.bf16.xpose.msra.mxu0 0
    %504 = vmatprep.subr.bf16.mxu0 0
    %505 = vmatpush2.bf16.xpose.msra.mxu0 0
    %506 = vmatprep.subr.bf16.mxu0 0
    %507 = vmatpush2.bf16.xpose.msra.mxu0 0
    %508 = vmatprep.mubr.bf16.mxu0 0
    %509 = vmatmul.mubr.bf16.gmra.mxu0 %v471
    %v510 = vpop.f32.mrf.mxu0
    %v511 = vadd.f32 0.0, %v510
    %v512 = vpop.f32.mrf.mxu0
    %v513 = vpop.f32.mrf.mxu0
    %v514 = vpop.f32.mrf.mxu0
    %515 = vdwg.mxu0
    %v517 = vsel %vm377, %v341, 0
    %v520 = vsel %vm377, %v355, 0
    %522 = vmatprep.subr.bf16.mxu0 0
    %523 = vmatpush1.bf16.xpose.msra.mxu0 0
    %524 = vmatprep.subr.bf16.mxu0 0
    %525 = vmatpush1.bf16.xpose.msra.mxu0 0
    %526 = vmatprep.subr.bf16.mxu0 0
    %527 = vmatpush1.bf16.xpose.msra.mxu0 0
    %528 = vmatprep.subr.bf16.mxu0 0
    %529 = vmatpush1.bf16.xpose.msra.mxu0 0
    %530 = vmatprep.subr.bf16.mxu0 0
    %531 = vmatpush1.bf16.xpose.msra.mxu0 0
    %532 = vmatprep.subr.bf16.mxu0 0
    %533 = vmatpush1.bf16.xpose.msra.mxu0 0
    %534 = vmatprep.subr.bf16.mxu0 0
    %535 = vmatpush1.bf16.xpose.msra.mxu0 0
    %536 = vmatprep.subr.bf16.mxu0 0
    %537 = vmatpush1.bf16.xpose.msra.mxu0 %v520
    %538 = vmatprep.subr.bf16.mxu0 0
    %539 = vmatpush2.bf16.xpose.msra.mxu0 0
    %540 = vmatprep.subr.bf16.mxu0 0
    %541 = vmatpush2.bf16.xpose.msra.mxu0 0
    %542 = vmatprep.subr.bf16.mxu0 0
    %543 = vmatpush2.bf16.xpose.msra.mxu0 0
    %544 = vmatprep.subr.bf16.mxu0 0
    %545 = vmatpush2.bf16.xpose.msra.mxu0 0
    %546 = vmatprep.subr.bf16.mxu0 0
    %547 = vmatpush2.bf16.xpose.msra.mxu0 0
    %548 = vmatprep.subr.bf16.mxu0 0
    %549 = vmatpush2.bf16.xpose.msra.mxu0 0
    %550 = vmatprep.subr.bf16.mxu0 0
    %551 = vmatpush2.bf16.xpose.msra.mxu0 0
    %552 = vmatprep.subr.bf16.mxu0 0
    %553 = vmatpush2.bf16.xpose.msra.mxu0 0
    %554 = vmatprep.mubr.bf16.mxu0 0
    %555 = vmatmul.mubr.bf16.gmra.mxu0 %v517
    %v556 = vpop.f32.mrf.mxu0
    %v557 = vadd.f32 0.0, %v556
    %v558 = vpop.f32.mrf.mxu0
    %v559 = vpop.f32.mrf.mxu0
    %v560 = vpop.f32.mrf.mxu0
    %561 = vdwg.mxu0
    %v563 = vsel %vm377, %v342, 0
    %v566 = vsel %vm377, %v356, 0
    %568 = vmatprep.subr.bf16.mxu0 0
    %569 = vmatpush1.bf16.xpose.msra.mxu0 0
    %570 = vmatprep.subr.bf16.mxu0 0
    %571 = vmatpush1.bf16.xpose.msra.mxu0 0
    %572 = vmatprep.subr.bf16.mxu0 0
    %573 = vmatpush1.bf16.xpose.msra.mxu0 0
    %574 = vmatprep.subr.bf16.mxu0 0
    %575 = vmatpush1.bf16.xpose.msra.mxu0 0
    %576 = vmatprep.subr.bf16.mxu0 0
    %577 = vmatpush1.bf16.xpose.msra.mxu0 0
    %578 = vmatprep.subr.bf16.mxu0 0
    %579 = vmatpush1.bf16.xpose.msra.mxu0 0
    %580 = vmatprep.subr.bf16.mxu0 0
    %581 = vmatpush1.bf16.xpose.msra.mxu0 0
    %582 = vmatprep.subr.bf16.mxu0 0
    %583 = vmatpush1.bf16.xpose.msra.mxu0 %v566
    %584 = vmatprep.subr.bf16.mxu0 0
    %585 = vmatpush2.bf16.xpose.msra.mxu0 0
    %586 = vmatprep.subr.bf16.mxu0 0
    %587 = vmatpush2.bf16.xpose.msra.mxu0 0
    %588 = vmatprep.subr.bf16.mxu0 0
    %589 = vmatpush2.bf16.xpose.msra.mxu0 0
    %590 = vmatprep.subr.bf16.mxu0 0
    %591 = vmatpush2.bf16.xpose.msra.mxu0 0
    %592 = vmatprep.subr.bf16.mxu0 0
    %593 = vmatpush2.bf16.xpose.msra.mxu0 0
    %594 = vmatprep.subr.bf16.mxu0 0
    %595 = vmatpush2.bf16.xpose.msra.mxu0 0
    %596 = vmatprep.subr.bf16.mxu0 0
    %597 = vmatpush2.bf16.xpose.msra.mxu0 0
    %598 = vmatprep.subr.bf16.mxu0 0
    %599 = vmatpush2.bf16.xpose.msra.mxu0 0
    %600 = vmatprep.mubr.bf16.mxu0 0
    %601 = vmatmul.mubr.bf16.gmra.mxu0 %v563
    %v602 = vpop.f32.mrf.mxu0
    %v603 = vadd.f32 0.0, %v602
    %v604 = vpop.f32.mrf.mxu0
    %v605 = vpop.f32.mrf.mxu0
    %v606 = vpop.f32.mrf.mxu0
    %607 = vdwg.mxu0
    %v609 = vsel %vm377, %v344, 0
    %v612 = vsel %vm377, %v358, 0
    %614 = vmatprep.subr.bf16.mxu0 0
    %615 = vmatpush1.bf16.xpose.msra.mxu0 0
    %616 = vmatprep.subr.bf16.mxu0 0
    %617 = vmatpush1.bf16.xpose.msra.mxu0 0
    %618 = vmatprep.subr.bf16.mxu0 0
    %619 = vmatpush1.bf16.xpose.msra.mxu0 0
    %620 = vmatprep.subr.bf16.mxu0 0
    %621 = vmatpush1.bf16.xpose.msra.mxu0 0
    %622 = vmatprep.subr.bf16.mxu0 0
    %623 = vmatpush1.bf16.xpose.msra.mxu0 0
    %624 = vmatprep.subr.bf16.mxu0 0
    %625 = vmatpush1.bf16.xpose.msra.mxu0 0
    %626 = vmatprep.subr.bf16.mxu0 0
    %627 = vmatpush1.bf16.xpose.msra.mxu0 0
    %628 = vmatprep.subr.bf16.mxu0 0
    %629 = vmatpush1.bf16.xpose.msra.mxu0 %v612
    %630 = vmatprep.subr.bf16.mxu0 0
    %631 = vmatpush2.bf16.xpose.msra.mxu0 0
    %632 = vmatprep.subr.bf16.mxu0 0
    %633 = vmatpush2.bf16.xpose.msra.mxu0 0
    %634 = vmatprep.subr.bf16.mxu0 0
    %635 = vmatpush2.bf16.xpose.msra.mxu0 0
    %636 = vmatprep.subr.bf16.mxu0 0
    %637 = vmatpush2.bf16.xpose.msra.mxu0 0
    %638 = vmatprep.subr.bf16.mxu0 0
    %639 = vmatpush2.bf16.xpose.msra.mxu0 0
    %640 = vmatprep.subr.bf16.mxu0 0
    %641 = vmatpush2.bf16.xpose.msra.mxu0 0
    %642 = vmatprep.subr.bf16.mxu0 0
    %643 = vmatpush2.bf16.xpose.msra.mxu0 0
    %644 = vmatprep.subr.bf16.mxu0 0
    %645 = vmatpush2.bf16.xpose.msra.mxu0 0
    %646 = vmatprep.mubr.bf16.mxu0 0
    %647 = vmatmul.mubr.bf16.gmra.mxu0 %v609
    %v648 = vpop.f32.mrf.mxu0
    %v649 = vadd.f32 0.0, %v648
    %v650 = vpop.f32.mrf.mxu0
    %v651 = vpop.f32.mrf.mxu0
    %v652 = vpop.f32.mrf.mxu0
    %653 = vdwg.mxu0
    %v655 = vsel %vm377, %v346, 0
    %v658 = vsel %vm377, %v360, 0
    %660 = vmatprep.subr.bf16.mxu0 0
    %661 = vmatpush1.bf16.xpose.msra.mxu0 0
    %662 = vmatprep.subr.bf16.mxu0 0
    %663 = vmatpush1.bf16.xpose.msra.mxu0 0
    %664 = vmatprep.subr.bf16.mxu0 0
    %665 = vmatpush1.bf16.xpose.msra.mxu0 0
    %666 = vmatprep.subr.bf16.mxu0 0
    %667 = vmatpush1.bf16.xpose.msra.mxu0 0
    %668 = vmatprep.subr.bf16.mxu0 0
    %669 = vmatpush1.bf16.xpose.msra.mxu0 0
    %670 = vmatprep.subr.bf16.mxu0 0
    %671 = vmatpush1.bf16.xpose.msra.mxu0 0
    %672 = vmatprep.subr.bf16.mxu0 0
    %673 = vmatpush1.bf16.xpose.msra.mxu0 0
    %674 = vmatprep.subr.bf16.mxu0 0
    %675 = vmatpush1.bf16.xpose.msra.mxu0 %v658
    %676 = vmatprep.subr.bf16.mxu0 0
    %677 = vmatpush2.bf16.xpose.msra.mxu0 0
    %678 = vmatprep.subr.bf16.mxu0 0
    %679 = vmatpush2.bf16.xpose.msra.mxu0 0
    %680 = vmatprep.subr.bf16.mxu0 0
    %681 = vmatpush2.bf16.xpose.msra.mxu0 0
    %682 = vmatprep.subr.bf16.mxu0 0
    %683 = vmatpush2.bf16.xpose.msra.mxu0 0
    %684 = vmatprep.subr.bf16.mxu0 0
    %685 = vmatpush2.bf16.xpose.msra.mxu0 0
    %686 = vmatprep.subr.bf16.mxu0 0
    %687 = vmatpush2.bf16.xpose.msra.mxu0 0
    %688 = vmatprep.subr.bf16.mxu0 0
    %689 = vmatpush2.bf16.xpose.msra.mxu0 0
    %690 = vmatprep.subr.bf16.mxu0 0
    %691 = vmatpush2.bf16.xpose.msra.mxu0 0
    %692 = vmatprep.mubr.bf16.mxu0 0
    %693 = vmatmul.mubr.bf16.gmra.mxu0 %v655
    %v694 = vpop.f32.mrf.mxu0
    %v695 = vadd.f32 0.0, %v694
    %v696 = vpop.f32.mrf.mxu0
    %v697 = vpop.f32.mrf.mxu0
    %v698 = vpop.f32.mrf.mxu0
    %699 = vdwg.mxu0
    %v701 = vsel %vm377, %v348, 0
    %v704 = vsel %vm377, %v362, 0
    %706 = vmatprep.subr.bf16.mxu0 0
    %707 = vmatpush1.bf16.xpose.msra.mxu0 0
    %708 = vmatprep.subr.bf16.mxu0 0
    %709 = vmatpush1.bf16.xpose.msra.mxu0 0
    %710 = vmatprep.subr.bf16.mxu0 0
    %711 = vmatpush1.bf16.xpose.msra.mxu0 0
    %712 = vmatprep.subr.bf16.mxu0 0
    %713 = vmatpush1.bf16.xpose.msra.mxu0 0
    %714 = vmatprep.subr.bf16.mxu0 0
    %715 = vmatpush1.bf16.xpose.msra.mxu0 0
    %716 = vmatprep.subr.bf16.mxu0 0
    %717 = vmatpush1.bf16.xpose.msra.mxu0 0
    %718 = vmatprep.subr.bf16.mxu0 0
    %719 = vmatpush1.bf16.xpose.msra.mxu0 0
    %720 = vmatprep.subr.bf16.mxu0 0
    %721 = vmatpush1.bf16.xpose.msra.mxu0 %v704
    %722 = vmatprep.subr.bf16.mxu0 0
    %723 = vmatpush2.bf16.xpose.msra.mxu0 0
    %724 = vmatprep.subr.bf16.mxu0 0
    %725 = vmatpush2.bf16.xpose.msra.mxu0 0
    %726 = vmatprep.subr.bf16.mxu0 0
    %727 = vmatpush2.bf16.xpose.msra.mxu0 0
    %728 = vmatprep.subr.bf16.mxu0 0
    %729 = vmatpush2.bf16.xpose.msra.mxu0 0
    %730 = vmatprep.subr.bf16.mxu0 0
    %731 = vmatpush2.bf16.xpose.msra.mxu0 0
    %732 = vmatprep.subr.bf16.mxu0 0
    %733 = vmatpush2.bf16.xpose.msra.mxu0 0
    %734 = vmatprep.subr.bf16.mxu0 0
    %735 = vmatpush2.bf16.xpose.msra.mxu0 0
    %736 = vmatprep.subr.bf16.mxu0 0
    %737 = vmatpush2.bf16.xpose.msra.mxu0 0
    %738 = vmatprep.mubr.bf16.mxu0 0
    %739 = vmatmul.mubr.bf16.gmra.mxu0 %v701
    %v740 = vpop.f32.mrf.mxu0
    %v741 = vadd.f32 0.0, %v740
    %v742 = vpop.f32.mrf.mxu0
    %v743 = vpop.f32.mrf.mxu0
    %v744 = vpop.f32.mrf.mxu0
    %745 = vdwg.mxu0
    %v746 = vsel %vm377, %v419, -inf
    %747 = vmax.xlane.f32.xlu0 %v746
    %v748 = vpop.xlane.xlu0 %747
    %v749 = vsel %vm377, %v465, -inf
    %750 = vmax.xlane.f32.xlu0 %v749
    %v751 = vpop.xlane.xlu0 %750
    %v752 = vsel %vm377, %v511, -inf
    %753 = vmax.xlane.f32.xlu0 %v752
    %v754 = vpop.xlane.xlu0 %753
    %v755 = vsel %vm377, %v557, -inf
    %756 = vmax.xlane.f32.xlu0 %v755
    %v757 = vpop.xlane.xlu0 %756
    %v758 = vsel %vm377, %v603, -inf
    %759 = vmax.xlane.f32.xlu0 %v758
    %v760 = vpop.xlane.xlu0 %759
    %v761 = vsel %vm377, %v649, -inf
    %762 = vmax.xlane.f32.xlu0 %v761
    %v763 = vpop.xlane.xlu0 %762
    %v764 = vsel %vm377, %v695, -inf
    %765 = vmax.xlane.f32.xlu0 %v764
    %v766 = vpop.xlane.xlu0 %765
    %v767 = vsel %vm377, %v741, -inf
    %768 = vmax.xlane.f32.xlu0 %v767
    %v769 = vpop.xlane.xlu0 %768
    %v770 = vsub.f32 %v419, %v748
    %v771 = vsub.f32 %v465, %v751
    %v772 = vsub.f32 %v511, %v754
    %v773 = vsub.f32 %v557, %v757
    %v774 = vsub.f32 %v603, %v760
    %v775 = vsub.f32 %v649, %v763
    %v776 = vsub.f32 %v695, %v766
    %v777 = vsub.f32 %v741, %v769
    %v778 = vmul.f32 %v770, 1.442695
    %v779 = vpow.pop %v778
    %v780 = vmul.f32 %v771, 1.442695
    %v781 = vpow.pop %v780
    %v782 = vmul.f32 %v772, 1.442695
    %v783 = vpow.pop %v782
    %v784 = vmul.f32 %v773, 1.442695
    %v785 = vpow.pop %v784
    %v786 = vmul.f32 %v774, 1.442695
    %v787 = vpow.pop %v786
    %v788 = vmul.f32 %v775, 1.442695
    %v789 = vpow.pop %v788
    %v790 = vmul.f32 %v776, 1.442695
    %v791 = vpow.pop %v790
    %v792 = vmul.f32 %v777, 1.442695
    %v793 = vpow.pop %v792
    %v794 = vsel %vm377, %v779, 0.0
    %795 = vadd.xlane.f32.xlu0 %v794
    %v796 = vpop.xlane.xlu0 %795
    %v797 = vsel %vm377, %v781, 0.0
    %798 = vadd.xlane.f32.xlu0 %v797
    %v799 = vpop.xlane.xlu0 %798
    %v800 = vsel %vm377, %v783, 0.0
    %801 = vadd.xlane.f32.xlu0 %v800
    %v802 = vpop.xlane.xlu0 %801
    %v803 = vsel %vm377, %v785, 0.0
    %804 = vadd.xlane.f32.xlu0 %v803
    %v805 = vpop.xlane.xlu0 %804
    %v806 = vsel %vm377, %v787, 0.0
    %807 = vadd.xlane.f32.xlu0 %v806
    %v808 = vpop.xlane.xlu0 %807
    %v809 = vsel %vm377, %v789, 0.0
    %810 = vadd.xlane.f32.xlu0 %v809
    %v811 = vpop.xlane.xlu0 %810
    %v812 = vsel %vm377, %v791, 0.0
    %813 = vadd.xlane.f32.xlu0 %v812
    %v814 = vpop.xlane.xlu0 %813
    %v815 = vsel %vm377, %v793, 0.0
    %816 = vadd.xlane.f32.xlu0 %v815
    %v817 = vpop.xlane.xlu0 %816
    %v818 = vrcp.pop %v796
    %v819 = vrcp.pop %v799
    %v820 = vrcp.pop %v802
    %v821 = vrcp.pop %v805
    %v822 = vrcp.pop %v808
    %v823 = vrcp.pop %v811
    %v824 = vrcp.pop %v814
    %v825 = vrcp.pop %v817
    %v826 = vmul.f32 %v779, %v818
    %v827 = vmul.f32 %v781, %v819
    %v828 = vmul.f32 %v783, %v820
    %v829 = vmul.f32 %v785, %v821
    %v830 = vmul.f32 %v787, %v822
    %v831 = vmul.f32 %v789, %v823
    %v832 = vmul.f32 %v791, %v824
    %v833 = vmul.f32 %v793, %v825
    %v834 = vpack.c.bf16 %v826, %v826
    %v835 = vpack.c.bf16 %v827, %v827
    %v836 = vpack.c.bf16 %v828, %v828
    %v837 = vpack.c.bf16 %v829, %v829
    %v838 = vpack.c.bf16 %v830, %v830
    %v839 = vpack.c.bf16 %v831, %v831
    %v840 = vpack.c.bf16 %v832, %v832
    %v841 = vpack.c.bf16 %v833, %v833
    %v843 = vsel %vm377, %v834, 0
    %vm845 = vcmask 1043456
    %v847 = vsel %vm845, %v334, 0
    %849 = vmatprep.subr.bf16.mxu0 0
    %850 = vmatpush1.bf16.msra.mxu0 0
    %851 = vmatprep.subr.bf16.mxu0 0
    %852 = vmatpush1.bf16.msra.mxu0 0
    %853 = vmatprep.subr.bf16.mxu0 0
    %854 = vmatpush1.bf16.msra.mxu0 0
    %855 = vmatprep.subr.bf16.mxu0 0
    %856 = vmatpush1.bf16.msra.mxu0 0
    %857 = vmatprep.subr.bf16.mxu0 0
    %858 = vmatpush1.bf16.msra.mxu0 0
    %859 = vmatprep.subr.bf16.mxu0 0
    %860 = vmatpush1.bf16.msra.mxu0 0
    %861 = vmatprep.subr.bf16.mxu0 0
    %862 = vmatpush1.bf16.msra.mxu0 0
    %863 = vmatprep.subr.bf16.mxu0 0
    %864 = vmatpush1.bf16.msra.mxu0 %v847
    %865 = vmatprep.subr.bf16.mxu0 0
    %866 = vmatpush2.bf16.msra.mxu0 0
    %867 = vmatprep.subr.bf16.mxu0 0
    %868 = vmatpush2.bf16.msra.mxu0 0
    %869 = vmatprep.subr.bf16.mxu0 0
    %870 = vmatpush2.bf16.msra.mxu0 0
    %871 = vmatprep.subr.bf16.mxu0 0
    %872 = vmatpush2.bf16.msra.mxu0 0
    %873 = vmatprep.subr.bf16.mxu0 0
    %874 = vmatpush2.bf16.msra.mxu0 0
    %875 = vmatprep.subr.bf16.mxu0 0
    %876 = vmatpush2.bf16.msra.mxu0 0
    %877 = vmatprep.subr.bf16.mxu0 0
    %878 = vmatpush2.bf16.msra.mxu0 0
    %879 = vmatprep.subr.bf16.mxu0 0
    %880 = vmatpush2.bf16.msra.mxu0 0
    %881 = vmatprep.mubr.bf16.mxu0 0
    %882 = vmatmul.mubr.bf16.gmra.mxu0 %v843
    %v883 = vpop.f32.mrf.mxu0
    %v884 = vadd.f32 0.0, %v883
    %v885 = vpop.f32.mrf.mxu0
    %v886 = vpop.f32.mrf.mxu0
    %v887 = vpop.f32.mrf.mxu0
    %888 = vdwg.mxu0
    %v890 = vsel %vm377, %v835, 0
    %v893 = vsel %vm845, %v365, 0
    %895 = vmatprep.subr.bf16.mxu0 0
    %896 = vmatpush1.bf16.msra.mxu0 0
    %897 = vmatprep.subr.bf16.mxu0 0
    %898 = vmatpush1.bf16.msra.mxu0 0
    %899 = vmatprep.subr.bf16.mxu0 0
    %900 = vmatpush1.bf16.msra.mxu0 0
    %901 = vmatprep.subr.bf16.mxu0 0
    %902 = vmatpush1.bf16.msra.mxu0 0
    %903 = vmatprep.subr.bf16.mxu0 0
    %904 = vmatpush1.bf16.msra.mxu0 0
    %905 = vmatprep.subr.bf16.mxu0 0
    %906 = vmatpush1.bf16.msra.mxu0 0
    %907 = vmatprep.subr.bf16.mxu0 0
    %908 = vmatpush1.bf16.msra.mxu0 0
    %909 = vmatprep.subr.bf16.mxu0 0
    %910 = vmatpush1.bf16.msra.mxu0 %v893
    %911 = vmatprep.subr.bf16.mxu0 0
    %912 = vmatpush2.bf16.msra.mxu0 0
    %913 = vmatprep.subr.bf16.mxu0 0
    %914 = vmatpush2.bf16.msra.mxu0 0
    %915 = vmatprep.subr.bf16.mxu0 0
    %916 = vmatpush2.bf16.msra.mxu0 0
    %917 = vmatprep.subr.bf16.mxu0 0
    %918 = vmatpush2.bf16.msra.mxu0 0
    %919 = vmatprep.subr.bf16.mxu0 0
    %920 = vmatpush2.bf16.msra.mxu0 0
    %921 = vmatprep.subr.bf16.mxu0 0
    %922 = vmatpush2.bf16.msra.mxu0 0
    %923 = vmatprep.subr.bf16.mxu0 0
    %924 = vmatpush2.bf16.msra.mxu0 0
    %925 = vmatprep.subr.bf16.mxu0 0
    %926 = vmatpush2.bf16.msra.mxu0 0
    %927 = vmatprep.mubr.bf16.mxu0 0
    %928 = vmatmul.mubr.bf16.gmra.mxu0 %v890
    %v929 = vpop.f32.mrf.mxu0
    %v930 = vadd.f32 0.0, %v929
    %v931 = vpop.f32.mrf.mxu0
    %v932 = vpop.f32.mrf.mxu0
    %v933 = vpop.f32.mrf.mxu0
    %934 = vdwg.mxu0
    %v936 = vsel %vm377, %v836, 0
    %v939 = vsel %vm845, %v367, 0
    %941 = vmatprep.subr.bf16.mxu0 0
    %942 = vmatpush1.bf16.msra.mxu0 0
    %943 = vmatprep.subr.bf16.mxu0 0
    %944 = vmatpush1.bf16.msra.mxu0 0
    %945 = vmatprep.subr.bf16.mxu0 0
    %946 = vmatpush1.bf16.msra.mxu0 0
    %947 = vmatprep.subr.bf16.mxu0 0
    %948 = vmatpush1.bf16.msra.mxu0 0
    %949 = vmatprep.subr.bf16.mxu0 0
    %950 = vmatpush1.bf16.msra.mxu0 0
    %951 = vmatprep.subr.bf16.mxu0 0
    %952 = vmatpush1.bf16.msra.mxu0 0
    %953 = vmatprep.subr.bf16.mxu0 0
    %954 = vmatpush1.bf16.msra.mxu0 0
    %955 = vmatprep.subr.bf16.mxu0 0
    %956 = vmatpush1.bf16.msra.mxu0 %v939
    %957 = vmatprep.subr.bf16.mxu0 0
    %958 = vmatpush2.bf16.msra.mxu0 0
    %959 = vmatprep.subr.bf16.mxu0 0
    %960 = vmatpush2.bf16.msra.mxu0 0
    %961 = vmatprep.subr.bf16.mxu0 0
    %962 = vmatpush2.bf16.msra.mxu0 0
    %963 = vmatprep.subr.bf16.mxu0 0
    %964 = vmatpush2.bf16.msra.mxu0 0
    %965 = vmatprep.subr.bf16.mxu0 0
    %966 = vmatpush2.bf16.msra.mxu0 0
    %967 = vmatprep.subr.bf16.mxu0 0
    %968 = vmatpush2.bf16.msra.mxu0 0
    %969 = vmatprep.subr.bf16.mxu0 0
    %970 = vmatpush2.bf16.msra.mxu0 0
    %971 = vmatprep.subr.bf16.mxu0 0
    %972 = vmatpush2.bf16.msra.mxu0 0
    %973 = vmatprep.mubr.bf16.mxu0 0
    %974 = vmatmul.mubr.bf16.gmra.mxu0 %v936
    %v975 = vpop.f32.mrf.mxu0
    %v976 = vadd.f32 0.0, %v975
    %v977 = vpop.f32.mrf.mxu0
    %v978 = vpop.f32.mrf.mxu0
    %v979 = vpop.f32.mrf.mxu0
    %980 = vdwg.mxu0
    %v982 = vsel %vm377, %v837, 0
    %v985 = vsel %vm845, %v369, 0
    %987 = vmatprep.subr.bf16.mxu0 0
    %988 = vmatpush1.bf16.msra.mxu0 0
    %989 = vmatprep.subr.bf16.mxu0 0
    %990 = vmatpush1.bf16.msra.mxu0 0
    %991 = vmatprep.subr.bf16.mxu0 0
    %992 = vmatpush1.bf16.msra.mxu0 0
    %993 = vmatprep.subr.bf16.mxu0 0
    %994 = vmatpush1.bf16.msra.mxu0 0
    %995 = vmatprep.subr.bf16.mxu0 0
    %996 = vmatpush1.bf16.msra.mxu0 0
    %997 = vmatprep.subr.bf16.mxu0 0
    %998 = vmatpush1.bf16.msra.mxu0 0
    %999 = vmatprep.subr.bf16.mxu0 0
    %1000 = vmatpush1.bf16.msra.mxu0 0
    %1001 = vmatprep.subr.bf16.mxu0 0
    %1002 = vmatpush1.bf16.msra.mxu0 %v985
    %1003 = vmatprep.subr.bf16.mxu0 0
    %1004 = vmatpush2.bf16.msra.mxu0 0
    %1005 = vmatprep.subr.bf16.mxu0 0
    %1006 = vmatpush2.bf16.msra.mxu0 0
    %1007 = vmatprep.subr.bf16.mxu0 0
    %1008 = vmatpush2.bf16.msra.mxu0 0
    %1009 = vmatprep.subr.bf16.mxu0 0
    %1010 = vmatpush2.bf16.msra.mxu0 0
    %1011 = vmatprep.subr.bf16.mxu0 0
    %1012 = vmatpush2.bf16.msra.mxu0 0
    %1013 = vmatprep.subr.bf16.mxu0 0
    %1014 = vmatpush2.bf16.msra.mxu0 0
    %1015 = vmatprep.subr.bf16.mxu0 0
    %1016 = vmatpush2.bf16.msra.mxu0 0
    %1017 = vmatprep.subr.bf16.mxu0 0
    %1018 = vmatpush2.bf16.msra.mxu0 0
    %1019 = vmatprep.mubr.bf16.mxu0 0
    %1020 = vmatmul.mubr.bf16.gmra.mxu0 %v982
    %v1021 = vpop.f32.mrf.mxu0
    %v1022 = vadd.f32 0.0, %v1021
    %v1023 = vpop.f32.mrf.mxu0
    %v1024 = vpop.f32.mrf.mxu0
    %v1025 = vpop.f32.mrf.mxu0
    %1026 = vdwg.mxu0
    %v1028 = vsel %vm377, %v838, 0
    %v1031 = vsel %vm845, %v370, 0
    %1033 = vmatprep.subr.bf16.mxu0 0
    %1034 = vmatpush1.bf16.msra.mxu0 0
    %1035 = vmatprep.subr.bf16.mxu0 0
    %1036 = vmatpush1.bf16.msra.mxu0 0
    %1037 = vmatprep.subr.bf16.mxu0 0
    %1038 = vmatpush1.bf16.msra.mxu0 0
    %1039 = vmatprep.subr.bf16.mxu0 0
    %1040 = vmatpush1.bf16.msra.mxu0 0
    %1041 = vmatprep.subr.bf16.mxu0 0
    %1042 = vmatpush1.bf16.msra.mxu0 0
    %1043 = vmatprep.subr.bf16.mxu0 0
    %1044 = vmatpush1.bf16.msra.mxu0 0
    %1045 = vmatprep.subr.bf16.mxu0 0
    %1046 = vmatpush1.bf16.msra.mxu0 0
    %1047 = vmatprep.subr.bf16.mxu0 0
    %1048 = vmatpush1.bf16.msra.mxu0 %v1031
    %1049 = vmatprep.subr.bf16.mxu0 0
    %1050 = vmatpush2.bf16.msra.mxu0 0
    %1051 = vmatprep.subr.bf16.mxu0 0
    %1052 = vmatpush2.bf16.msra.mxu0 0
    %1053 = vmatprep.subr.bf16.mxu0 0
    %1054 = vmatpush2.bf16.msra.mxu0 0
    %1055 = vmatprep.subr.bf16.mxu0 0
    %1056 = vmatpush2.bf16.msra.mxu0 0
    %1057 = vmatprep.subr.bf16.mxu0 0
    %1058 = vmatpush2.bf16.msra.mxu0 0
    %1059 = vmatprep.subr.bf16.mxu0 0
    %1060 = vmatpush2.bf16.msra.mxu0 0
    %1061 = vmatprep.subr.bf16.mxu0 0
    %1062 = vmatpush2.bf16.msra.mxu0 0
    %1063 = vmatprep.subr.bf16.mxu0 0
    %1064 = vmatpush2.bf16.msra.mxu0 0
    %1065 = vmatprep.mubr.bf16.mxu0 0
    %1066 = vmatmul.mubr.bf16.gmra.mxu0 %v1028
    %v1067 = vpop.f32.mrf.mxu0
    %v1068 = vadd.f32 0.0, %v1067
    %v1069 = vpop.f32.mrf.mxu0
    %v1070 = vpop.f32.mrf.mxu0
    %v1071 = vpop.f32.mrf.mxu0
    %1072 = vdwg.mxu0
    %v1074 = vsel %vm377, %v839, 0
    %v1077 = vsel %vm845, %v372, 0
    %1079 = vmatprep.subr.bf16.mxu0 0
    %1080 = vmatpush1.bf16.msra.mxu0 0
    %1081 = vmatprep.subr.bf16.mxu0 0
    %1082 = vmatpush1.bf16.msra.mxu0 0
    %1083 = vmatprep.subr.bf16.mxu0 0
    %1084 = vmatpush1.bf16.msra.mxu0 0
    %1085 = vmatprep.subr.bf16.mxu0 0
    %1086 = vmatpush1.bf16.msra.mxu0 0
    %1087 = vmatprep.subr.bf16.mxu0 0
    %1088 = vmatpush1.bf16.msra.mxu0 0
    %1089 = vmatprep.subr.bf16.mxu0 0
    %1090 = vmatpush1.bf16.msra.mxu0 0
    %1091 = vmatprep.subr.bf16.mxu0 0
    %1092 = vmatpush1.bf16.msra.mxu0 0
    %1093 = vmatprep.subr.bf16.mxu0 0
    %1094 = vmatpush1.bf16.msra.mxu0 %v1077
    %1095 = vmatprep.subr.bf16.mxu0 0
    %1096 = vmatpush2.bf16.msra.mxu0 0
    %1097 = vmatprep.subr.bf16.mxu0 0
    %1098 = vmatpush2.bf16.msra.mxu0 0
    %1099 = vmatprep.subr.bf16.mxu0 0
    %1100 = vmatpush2.bf16.msra.mxu0 0
    %1101 = vmatprep.subr.bf16.mxu0 0
    %1102 = vmatpush2.bf16.msra.mxu0 0
    %1103 = vmatprep.subr.bf16.mxu0 0
    %1104 = vmatpush2.bf16.msra.mxu0 0
    %1105 = vmatprep.subr.bf16.mxu0 0
    %1106 = vmatpush2.bf16.msra.mxu0 0
    %1107 = vmatprep.subr.bf16.mxu0 0
    %1108 = vmatpush2.bf16.msra.mxu0 0
    %1109 = vmatprep.subr.bf16.mxu0 0
    %1110 = vmatpush2.bf16.msra.mxu0 0
    %1111 = vmatprep.mubr.bf16.mxu0 0
    %1112 = vmatmul.mubr.bf16.gmra.mxu0 %v1074
    %v1113 = vpop.f32.mrf.mxu0
    %v1114 = vadd.f32 0.0, %v1113
    %v1115 = vpop.f32.mrf.mxu0
    %v1116 = vpop.f32.mrf.mxu0
    %v1117 = vpop.f32.mrf.mxu0
    %1118 = vdwg.mxu0
    %v1120 = vsel %vm377, %v840, 0
    %v1123 = vsel %vm845, %v374, 0
    %1125 = vmatprep.subr.bf16.mxu0 0
    %1126 = vmatpush1.bf16.msra.mxu0 0
    %1127 = vmatprep.subr.bf16.mxu0 0
    %1128 = vmatpush1.bf16.msra.mxu0 0
    %1129 = vmatprep.subr.bf16.mxu0 0
    %1130 = vmatpush1.bf16.msra.mxu0 0
    %1131 = vmatprep.subr.bf16.mxu0 0
    %1132 = vmatpush1.bf16.msra.mxu0 0
    %1133 = vmatprep.subr.bf16.mxu0 0
    %1134 = vmatpush1.bf16.msra.mxu0 0
    %1135 = vmatprep.subr.bf16.mxu0 0
    %1136 = vmatpush1.bf16.msra.mxu0 0
    %1137 = vmatprep.subr.bf16.mxu0 0
    %1138 = vmatpush1.bf16.msra.mxu0 0
    %1139 = vmatprep.subr.bf16.mxu0 0
    %1140 = vmatpush1.bf16.msra.mxu0 %v1123
    %1141 = vmatprep.subr.bf16.mxu0 0
    %1142 = vmatpush2.bf16.msra.mxu0 0
    %1143 = vmatprep.subr.bf16.mxu0 0
    %1144 = vmatpush2.bf16.msra.mxu0 0
    %1145 = vmatprep.subr.bf16.mxu0 0
    %1146 = vmatpush2.bf16.msra.mxu0 0
    %1147 = vmatprep.subr.bf16.mxu0 0
    %1148 = vmatpush2.bf16.msra.mxu0 0
    %1149 = vmatprep.subr.bf16.mxu0 0
    %1150 = vmatpush2.bf16.msra.mxu0 0
    %1151 = vmatprep.subr.bf16.mxu0 0
    %1152 = vmatpush2.bf16.msra.mxu0 0
    %1153 = vmatprep.subr.bf16.mxu0 0
    %1154 = vmatpush2.bf16.msra.mxu0 0
    %1155 = vmatprep.subr.bf16.mxu0 0
    %1156 = vmatpush2.bf16.msra.mxu0 0
    %1157 = vmatprep.mubr.bf16.mxu0 0
    %1158 = vmatmul.mubr.bf16.gmra.mxu0 %v1120
    %v1159 = vpop.f32.mrf.mxu0
    %v1160 = vadd.f32 0.0, %v1159
    %v1161 = vpop.f32.mrf.mxu0
    %v1162 = vpop.f32.mrf.mxu0
    %v1163 = vpop.f32.mrf.mxu0
    %1164 = vdwg.mxu0
    %v1166 = vsel %vm377, %v841, 0
    %v1169 = vsel %vm845, %v376, 0
    %1171 = vmatprep.subr.bf16.mxu0 0
    %1172 = vmatpush1.bf16.msra.mxu0 0
    %1173 = vmatprep.subr.bf16.mxu0 0
    %1174 = vmatpush1.bf16.msra.mxu0 0
    %1175 = vmatprep.subr.bf16.mxu0 0
    %1176 = vmatpush1.bf16.msra.mxu0 0
    %1177 = vmatprep.subr.bf16.mxu0 0
    %1178 = vmatpush1.bf16.msra.mxu0 0
    %1179 = vmatprep.subr.bf16.mxu0 0
    %1180 = vmatpush1.bf16.msra.mxu0 0
    %1181 = vmatprep.subr.bf16.mxu0 0
    %1182 = vmatpush1.bf16.msra.mxu0 0
    %1183 = vmatprep.subr.bf16.mxu0 0
    %1184 = vmatpush1.bf16.msra.mxu0 0
    %1185 = vmatprep.subr.bf16.mxu0 0
    %1186 = vmatpush1.bf16.msra.mxu0 %v1169
    %1187 = vmatprep.subr.bf16.mxu0 0
    %1188 = vmatpush2.bf16.msra.mxu0 0
    %1189 = vmatprep.subr.bf16.mxu0 0
    %1190 = vmatpush2.bf16.msra.mxu0 0
    %1191 = vmatprep.subr.bf16.mxu0 0
    %1192 = vmatpush2.bf16.msra.mxu0 0
    %1193 = vmatprep.subr.bf16.mxu0 0
    %1194 = vmatpush2.bf16.msra.mxu0 0
    %1195 = vmatprep.subr.bf16.mxu0 0
    %1196 = vmatpush2.bf16.msra.mxu0 0
    %1197 = vmatprep.subr.bf16.mxu0 0
    %1198 = vmatpush2.bf16.msra.mxu0 0
    %1199 = vmatprep.subr.bf16.mxu0 0
    %1200 = vmatpush2.bf16.msra.mxu0 0
    %1201 = vmatprep.subr.bf16.mxu0 0
    %1202 = vmatpush2.bf16.msra.mxu0 0
    %1203 = vmatprep.mubr.bf16.mxu0 0
    %1204 = vmatmul.mubr.bf16.gmra.mxu0 %v1166
    %v1205 = vpop.f32.mrf.mxu0
    %v1206 = vadd.f32 0.0, %v1205
    %v1207 = vpop.f32.mrf.mxu0
    %v1208 = vpop.f32.mrf.mxu0
    %v1209 = vpop.f32.mrf.mxu0
    %1210 = vdwg.mxu0
    %1212 = vrot.lane.b32.xlu0 %v930, 8
    %v1213 = vpop.permute.xlu0 %1212
    %1216 = vrot.lane.b32.xlu0 %v976, 16
    %v1217 = vpop.permute.xlu0 %1216
    %1220 = vrot.lane.b32.xlu0 %v1022, 24
    %v1221 = vpop.permute.xlu0 %1220
    %v1223 = vsel %vm377, %v884, %v1213
    %vm1224 = vcmask 130048
    %v1225 = vsel %vm1224, %v1223, %v1217
    %vm1226 = vcmask 195584
    %v1227 = vsel %vm1226, %v1225, %v1221
    %1229 = vrot.lane.b32.xlu0 %v1114, 8
    %v1230 = vpop.permute.xlu0 %1229
    %1233 = vrot.lane.b32.xlu0 %v1160, 16
    %v1234 = vpop.permute.xlu0 %1233
    %1237 = vrot.lane.b32.xlu0 %v1206, 24
    %v1238 = vpop.permute.xlu0 %1237
    %v1240 = vsel %vm377, %v1068, %v1230
    %v1241 = vsel %vm1224, %v1240, %v1234
    %v1242 = vsel %vm1226, %v1241, %v1238
    %v1243 = vpack.c.bf16 %v1242, %v1227
    %v1244 = vld [vmem:[#allocation7] sm:$0xf]
    %v1245 = vld [vmem:[#allocation7 + $0x4] sm:$0xf]
    %v1246 = vld [vmem:[#allocation7 + $0x8] sm:$0xf]
    %v1247 = vld [vmem:[#allocation7 + $0xc] sm:$0xf]
    %v1248 = vld [vmem:[%s4] sm:$0x1]
    %v1250 = vlaneseq
    %v1251 = vshrl.u32 %v1250, 7
    %v1252 = vsub.s32 0, %v1251
    %v1253 = vrot.slane %v1248, %v1252
    %v1259 = vunpack.c.l.b16 %v1244
    %v1260 = vunpack.c.l.b16 %v1245
    %v1261 = vunpack.c.l.b16 %v1246
    %v1262 = vunpack.c.l.b16 %v1247
    %v1263 = vpack.c.b16 %v1260, %v1259
    %v1264 = vpack.c.b16 %v1262, %v1261
    %vm1267 = vcmask 261120
    %v1269 = vsel %vm1267, %v1243, 0
    %1271 = vmatprep.subr.bf16.mxu0 0
    %1272 = vmatpush1.bf16.msra.mxu0 0
    %1273 = vmatprep.subr.bf16.mxu0 0
    %1274 = vmatpush1.bf16.msra.mxu0 0
    %1275 = vmatprep.subr.bf16.mxu0 0
    %1276 = vmatpush1.bf16.msra.mxu0 0
    %1277 = vmatprep.subr.bf16.mxu0 0
    %1278 = vmatpush1.bf16.msra.mxu0 0
    %1279 = vmatprep.subr.bf16.mxu0 0
    %1280 = vmatpush1.bf16.msra.mxu0 0
    %1281 = vmatprep.subr.bf16.mxu0 0
    %1282 = vmatpush1.bf16.msra.mxu0 0
    %1283 = vmatprep.subr.bf16.mxu0 0
    %1284 = vmatpush1.bf16.msra.mxu0 %v1264
    %1285 = vmatprep.subr.bf16.mxu0 0
    %1286 = vmatpush1.bf16.msra.mxu0 %v1263
    %1287 = vmatprep.subr.bf16.mxu0 0
    %1288 = vmatpush2.bf16.msra.mxu0 0
    %1289 = vmatprep.subr.bf16.mxu0 0
    %1290 = vmatpush2.bf16.msra.mxu0 0
    %1291 = vmatprep.subr.bf16.mxu0 0
    %1292 = vmatpush2.bf16.msra.mxu0 0
    %1293 = vmatprep.subr.bf16.mxu0 0
    %1294 = vmatpush2.bf16.msra.mxu0 0
    %1295 = vmatprep.subr.bf16.mxu0 0
    %1296 = vmatpush2.bf16.msra.mxu0 0
    %1297 = vmatprep.subr.bf16.mxu0 0
    %1298 = vmatpush2.bf16.msra.mxu0 0
    %1299 = vmatprep.subr.bf16.mxu0 0
    %1300 = vmatpush2.bf16.msra.mxu0 0
    %1301 = vmatprep.subr.bf16.mxu0 0
    %1302 = vmatpush2.bf16.msra.mxu0 0
    %1303 = vmatprep.mubr.bf16.mxu0 0
    %1304 = vmatmul.mubr.bf16.gmra.mxu0 %v1269
    %v1305 = vpop.f32.mrf.mxu0
    %v1306 = vadd.f32 %v1253, %v1305
    %v1307 = vpop.f32.mrf.mxu0
    %v1308 = vpop.f32.mrf.mxu0
    %v1309 = vadd.f32 %v1253, %v1308
    %v1310 = vpop.f32.mrf.mxu0
    %1311 = vdwg.mxu0
    %1312 = vst [vmem:[#allocation8] sm:$0xff] %v1306
    %1313 = vst [vmem:[#allocation8 + $0x8] sm:$0xff] %v1309
    // Predicated region
    $region34: #{tpu_custom_call.1} parent=1 // pred_check
      _
    $region35: #{tpu_custom_call.1} parent=1 // pred_check_branch
      %1315 = sbr.rel (0) target = $region37
    $region36: #{tpu_custom_call.1} parent=1 // pred_region
      %s1317 = ssub.s32 256, 256
      %1318 = vsyncadd [#allocation4], %s1317
      %s1319 = sshll.u32 [#allocation8], 4
      %s1320 = int_to_ptr.vmem [resolvable:$true] %s1319
      %1325 = dma.vmem_to_hbm [thread:$0]  %s1320, 256, %s5, [#allocation4], 128, 128, 8
    $region37: #{tpu_custom_call.1} parent=1 // pred_fallthru
      _
    // Predicated region
    $region38: #{tpu_custom_call.1} parent=1 // pred_check
      _
    $region39: #{tpu_custom_call.1} parent=1 // pred_check_branch
      %1327 = sbr.rel (0) target = $region41
    $region40: #{tpu_custom_call.1} parent=1 // pred_region
      %1328 = dma.done [#allocation4], 256
    $region41: #{tpu_custom_call.1} parent=1 // pred_fallthru
      _
    %1329 = vsyncpa [#allocation3], 1
    %1330 = vsyncpa [#allocation6], 1
    %1331 = vsyncpa [#allocation4], 1

</llo_original>
